<compile_context>
chip_gen: v7x
topology: tpu7x:2x2x1
jax: 0.10.0
libtpu: 0.0.40
codegen_flags: <defaults>
</compile_context>

<pallas_src>
import functools

import jax
import jax.numpy as jnp
from jax.experimental import pallas as pl
from jax.experimental.pallas import tpu as pltpu


def compute_conv_dim(dim_size, k, p, s):
    return int((dim_size - k + 2 * p) / s + 1)


def _net_kernel(xp_ref, wconv_ref, bconv_ref, wlin_ref, blin_ref, out_ref,
                *, C_in, k, s, L_out, U):
    """One batch-tile of the fused Conv1d+BN+ReLU+Linear+softmax forward.

    xp_ref   : (C_in, s, TB, M)  phase-split input (lanes = strided time axis)
    wconv_ref: (U, C_in*k)       SMEM, conv weight folded with BN scale
    bconv_ref: (U,)              SMEM, conv bias folded with BN scale/shift
    wlin_ref : (U, L_out, Cpad)  linear weight reordered per conv unit
    blin_ref : (1, Cpad)         linear bias, padded classes set to -1e30
    out_ref  : (TB, Cpad)        softmax probabilities (lane-dense store)
    """
    # Load the C_in*k shifted windows once; reused for every conv unit.
    # xp[c, j % s, b, t + j // s] == x[b, c, t*stride + j]
    windows = []
    for c in range(C_in):
        for j in range(k):
            windows.append(xp_ref[c, j % s, :, pl.ds(j // s, L_out)])  # (TB, L_out)

    # Accumulate logits unit-by-unit: conv row via VPU FMAs -> ReLU -> MXU
    # matmul against that unit's (L_out, Cpad) slice of the linear weight.
    logits = jnp.zeros(out_ref.shape, dtype=jnp.float32)
    for u in range(U):
        z = jnp.zeros_like(windows[0])
        for c in range(C_in):
            for j in range(k):
                z = z + wconv_ref[u, c * k + j] * windows[c * k + j]
        z = jnp.maximum(z + bconv_ref[u], 0.0)                     # bias + ReLU
        logits = logits + jnp.dot(z, wlin_ref[u],
                                  preferred_element_type=jnp.float32)
    logits = logits + blin_ref[...]                                # pads -> -1e30

    # Softmax over classes; padded lanes give exp(-1e30 - m) == 0 exactly.
    m = jnp.max(logits, axis=1, keepdims=True)
    e = jnp.exp(logits - m)
    denom = jnp.sum(e, axis=1, keepdims=True)
    out_ref[...] = e * pl.reciprocal(denom, approx=True)


@functools.partial(jax.jit, static_argnames=("kernel_size", "stride"))
def net_forward(x, params, *, kernel_size, stride):
    """x: (B, C_in, H) float32. Returns softmax probabilities (B, num_classes)."""
    B, C_in, H = x.shape
    wconv = params["conv_w"]            # (U, C_in, k)   PyTorch layout
    bconv = params["conv_b"]            # (U,)
    gamma, beta = params["bn_gamma"], params["bn_beta"]
    rmean, rvar = params["bn_mean"], params["bn_var"]
    wlin = params["lin_w"]              # (num_classes, U*L_out)
    blin = params["lin_b"]              # (num_classes,)

    U, _, k = wconv.shape
    s = stride
    L_out = compute_conv_dim(H, k, 0, s)
    C = wlin.shape[0]
    Cpad = 128                          # lane-dense output slab
    eps = 1e-5

    # ---- fold BatchNorm (eval) into conv weight/bias (constants only) ----
    bn_scale = gamma / jnp.sqrt(rvar + eps)                            # (U,)
    wconv_f = (wconv * bn_scale[:, None, None]).reshape(U, C_in * k)   # (U, C_in*k)
    bconv_f = bconv * bn_scale + (beta - rmean * bn_scale)             # (U,)

    # Linear weight reordered to (U, L_out, Cpad); PyTorch flatten index = u*L_out + t.
    wlin_r = wlin.reshape(C, U, L_out).transpose(1, 2, 0)              # (U, L_out, C)
    wlin_r = jnp.pad(wlin_r, ((0, 0), (0, 0), (0, Cpad - C)))
    blin_p = jnp.full((1, Cpad), -1e30, jnp.float32).at[0, :C].set(blin)

    # Phase-split input (no im2col expansion): xp[c, r, b, m] = x[b, c, m*s + r].
    M = -(-H // s)
    x_pad = jnp.pad(x, ((0, 0), (0, 0), (0, M * s - H)))
    xp = x_pad.reshape(B, C_in, M, s).transpose(1, 3, 0, 2)            # (C_in, s, B, M)

    TB = B if (B <= 8 or B % 8 != 0) else 8
    grid = (B // TB,)

    kernel = functools.partial(_net_kernel, C_in=C_in, k=k, s=s, L_out=L_out, U=U)

    cost = pl.CostEstimate(
        flops=2 * B * L_out * U * (C_in * k + Cpad),
        transcendentals=B * Cpad,
        bytes_accessed=4 * (xp.size + wconv_f.size + bconv_f.size
                            + wlin_r.size + blin_p.size + B * Cpad),
    )

    out = pl.pallas_call(
        kernel,
        out_shape=jax.ShapeDtypeStruct((B, Cpad), jnp.float32),
        grid=grid,
        in_specs=[
            pl.BlockSpec((C_in, s, TB, M), lambda i: (0, 0, i, 0)),        # xp  (VMEM)
            pl.BlockSpec(memory_space=pltpu.MemorySpace.SMEM),             # wconv_f
            pl.BlockSpec(memory_space=pltpu.MemorySpace.SMEM),             # bconv_f
            pl.BlockSpec(memory_space=pltpu.MemorySpace.VMEM),             # wlin_r
            pl.BlockSpec(memory_space=pltpu.MemorySpace.VMEM),             # blin_p
        ],
        out_specs=pl.BlockSpec((TB, Cpad), lambda i: (i, 0)),
        compiler_params=pltpu.CompilerParams(dimension_semantics=("parallel",)),
        cost_estimate=cost,
    )(
        xp.astype(jnp.float32),
        wconv_f.astype(jnp.float32),
        bconv_f.astype(jnp.float32),
        wlin_r.astype(jnp.float32),
        blin_p.astype(jnp.float32),
    )
    return out[:, :C]


def reference_forward(x, params, *, kernel_size, stride):
    """Pure-JAX reference (no Pallas) for validation."""
    B, C_in, H = x.shape
    wconv, bconv = params["conv_w"], params["conv_b"]
    gamma, beta = params["bn_gamma"], params["bn_beta"]
    rmean, rvar = params["bn_mean"], params["bn_var"]
    wlin, blin = params["lin_w"], params["lin_b"]
    U, _, k = wconv.shape
    L_out = compute_conv_dim(H, k, 0, stride)
    eps = 1e-5

    idx = (jnp.arange(L_out) * stride)[:, None] + jnp.arange(k)[None, :]
    patches = x[:, :, idx]                                           # (B, C, L_out, k)
    conv = jnp.einsum("bclk,uck->bul", patches, wconv) + bconv[None, :, None]
    bn = (conv - rmean[None, :, None]) / jnp.sqrt(rvar[None, :, None] + eps)
    bn = bn * gamma[None, :, None] + beta[None, :, None]
    act = jnp.maximum(bn, 0.0)
    flat = act.reshape(B, U * L_out)                                 # (u, t) ordering
    logits = flat @ wlin.T + blin[None, :]
    return jax.nn.softmax(logits, axis=1)


if __name__ == "__main__":
    # Small shapes consistent with the module (original: C_in=1, H=1001).
    B, C_in, H = 2, 1, 64
    num_units, kernel_size, stride = 8, 5, 2
    num_classes = 2
    L_out = compute_conv_dim(H, kernel_size, 0, stride)

    key = jax.random.PRNGKey(0)
    k_x, k_cw, k_cb, k_g, k_b, k_m, k_v, k_lw, k_lb = jax.random.split(key, 9)

    x = jax.random.normal(k_x, (B, C_in, H), dtype=jnp.float32)

    params = {
        "conv_w": 0.1 * jax.random.normal(k_cw, (num_units, C_in, kernel_size), jnp.float32),
        "conv_b": 0.1 * jax.random.normal(k_cb, (num_units,), jnp.float32),
        "bn_gamma": 1.0 + 0.1 * jax.random.normal(k_g, (num_units,), jnp.float32),
        "bn_beta": 0.1 * jax.random.normal(k_b, (num_units,), jnp.float32),
        "bn_mean": 0.1 * jax.random.normal(k_m, (num_units,), jnp.float32),
        "bn_var": jnp.abs(1.0 + 0.1 * jax.random.normal(k_v, (num_units,), jnp.float32)),
        "lin_w": 0.05 * jax.random.normal(k_lw, (num_classes, num_units * L_out), jnp.float32),
        "lin_b": 0.05 * jax.random.normal(k_lb, (num_classes,), jnp.float32),
    }

    out = net_forward(x, params, kernel_size=kernel_size, stride=stride)
    out = jax.block_until_ready(out)

    ref = reference_forward(x, params, kernel_size=kernel_size, stride=stride)
    assert out.shape == (B, num_classes)
    # Tolerance slightly loosened vs pure-f32 because the softmax denominator
    # uses the EUP approximate reciprocal (pl.reciprocal(..., approx=True)).
    assert jnp.allclose(out, ref, rtol=2e-3, atol=2e-3), (out, ref)

    print("KERNEL_OK")
</pallas_src>

<mosaic_0001>
module attributes {stable_mosaic.version = 11 : i64} {
  func.func @_net_kernel(%arg0: i32, %arg1: memref<1x2x2x32xf32, #tpu.memory_space<vmem>>, %arg2: memref<8x5xf32, #tpu.memory_space<smem>>, %arg3: memref<8xf32, #tpu.memory_space<smem>>, %arg4: memref<8x30x128xf32, #tpu.memory_space<vmem>>, %arg5: memref<1x128xf32, #tpu.memory_space<vmem>>, %arg6: memref<2x128xf32, #tpu.memory_space<vmem>>) attributes {dimension_semantics = [#tpu.dimension_semantics<parallel>], iteration_bounds = array<i64: 1>, scalar_prefetch = 0 : i64, scratch_operands = 0 : i64, tpu.core_type = #tpu.core_type<tc>, window_params = [{transform_indices = @transform_0, window_bounds = array<i64: 1, 2, 2, 32>}, {transform_indices = @transform_1, window_bounds = array<i64: 8, 5>}, {transform_indices = @transform_2, window_bounds = array<i64: 8>}, {pipeline_mode = #tpu.pipeline_mode<synchronous>, transform_indices = @transform_3, window_bounds = array<i64: 8, 30, 128>}, {pipeline_mode = #tpu.pipeline_mode<synchronous>, transform_indices = @transform_4, window_bounds = array<i64: 1, 128>}, {transform_indices = @transform_5, window_bounds = array<i64: 2, 128>}]} {
    %c0 = arith.constant 0 : index
    %c0_0 = arith.constant 0 : index
    %c0_1 = arith.constant 0 : index
    %c0_2 = arith.constant 0 : index
    %0 = vector.load %arg1[%c0, %c0_0, %c0_1, %c0_2] : memref<1x2x2x32xf32, #tpu.memory_space<vmem>>, vector<1x1x2x30xf32>
    %1 = vector.shape_cast %0 : vector<1x1x2x30xf32> to vector<2x30xf32>
    %c0_3 = arith.constant 0 : index
    %c1 = arith.constant 1 : index
    %c0_4 = arith.constant 0 : index
    %c0_5 = arith.constant 0 : index
    %2 = vector.load %arg1[%c0_3, %c1, %c0_4, %c0_5] : memref<1x2x2x32xf32, #tpu.memory_space<vmem>>, vector<1x1x2x30xf32>
    %3 = vector.shape_cast %2 : vector<1x1x2x30xf32> to vector<2x30xf32>
    %c0_6 = arith.constant 0 : index
    %c0_7 = arith.constant 0 : index
    %c0_8 = arith.constant 0 : index
    %c1_9 = arith.constant 1 : index
    %4 = vector.load %arg1[%c0_6, %c0_7, %c0_8, %c1_9] : memref<1x2x2x32xf32, #tpu.memory_space<vmem>>, vector<1x1x2x30xf32>
    %5 = vector.shape_cast %4 : vector<1x1x2x30xf32> to vector<2x30xf32>
    %c0_10 = arith.constant 0 : index
    %c1_11 = arith.constant 1 : index
    %c0_12 = arith.constant 0 : index
    %c1_13 = arith.constant 1 : index
    %6 = vector.load %arg1[%c0_10, %c1_11, %c0_12, %c1_13] : memref<1x2x2x32xf32, #tpu.memory_space<vmem>>, vector<1x1x2x30xf32>
    %7 = vector.shape_cast %6 : vector<1x1x2x30xf32> to vector<2x30xf32>
    %c0_14 = arith.constant 0 : index
    %c0_15 = arith.constant 0 : index
    %c0_16 = arith.constant 0 : index
    %c2 = arith.constant 2 : index
    %8 = vector.load %arg1[%c0_14, %c0_15, %c0_16, %c2] : memref<1x2x2x32xf32, #tpu.memory_space<vmem>>, vector<1x1x2x30xf32>
    %9 = vector.shape_cast %8 : vector<1x1x2x30xf32> to vector<2x30xf32>
    %cst = arith.constant 0.000000e+00 : f32
    %10 = vector.broadcast %cst : f32 to vector<2x128xf32>
    %cst_17 = arith.constant 0.000000e+00 : f32
    %11 = vector.broadcast %cst_17 : f32 to vector<2x30xf32>
    %c0_18 = arith.constant 0 : index
    %c0_19 = arith.constant 0 : index
    %12 = memref.load %arg2[%c0_18, %c0_19] : memref<8x5xf32, #tpu.memory_space<smem>>
    %13 = vector.broadcast %12 : f32 to vector<2x30xf32>
    %14 = arith.mulf %13, %1 : vector<2x30xf32>
    %15 = arith.addf %11, %14 : vector<2x30xf32>
    %c0_20 = arith.constant 0 : index
    %c1_21 = arith.constant 1 : index
    %16 = memref.load %arg2[%c0_20, %c1_21] : memref<8x5xf32, #tpu.memory_space<smem>>
    %17 = vector.broadcast %16 : f32 to vector<2x30xf32>
    %18 = arith.mulf %17, %3 : vector<2x30xf32>
    %19 = arith.addf %15, %18 : vector<2x30xf32>
    %c0_22 = arith.constant 0 : index
    %c2_23 = arith.constant 2 : index
    %20 = memref.load %arg2[%c0_22, %c2_23] : memref<8x5xf32, #tpu.memory_space<smem>>
    %21 = vector.broadcast %20 : f32 to vector<2x30xf32>
    %22 = arith.mulf %21, %5 : vector<2x30xf32>
    %23 = arith.addf %19, %22 : vector<2x30xf32>
    %c0_24 = arith.constant 0 : index
    %c3 = arith.constant 3 : index
    %24 = memref.load %arg2[%c0_24, %c3] : memref<8x5xf32, #tpu.memory_space<smem>>
    %25 = vector.broadcast %24 : f32 to vector<2x30xf32>
    %26 = arith.mulf %25, %7 : vector<2x30xf32>
    %27 = arith.addf %23, %26 : vector<2x30xf32>
    %c0_25 = arith.constant 0 : index
    %c4 = arith.constant 4 : index
    %28 = memref.load %arg2[%c0_25, %c4] : memref<8x5xf32, #tpu.memory_space<smem>>
    %29 = vector.broadcast %28 : f32 to vector<2x30xf32>
    %30 = arith.mulf %29, %9 : vector<2x30xf32>
    %31 = arith.addf %27, %30 : vector<2x30xf32>
    %c0_26 = arith.constant 0 : index
    %32 = memref.load %arg3[%c0_26] : memref<8xf32, #tpu.memory_space<smem>>
    %33 = vector.broadcast %32 : f32 to vector<2x30xf32>
    %34 = arith.addf %31, %33 : vector<2x30xf32>
    %cst_27 = arith.constant 0.000000e+00 : f32
    %35 = vector.broadcast %cst_27 : f32 to vector<2x30xf32>
    %36 = arith.maximumf %34, %35 : vector<2x30xf32>
    %c0_28 = arith.constant 0 : index
    %c0_29 = arith.constant 0 : index
    %c0_30 = arith.constant 0 : index
    %37 = vector.load %arg4[%c0_28, %c0_29, %c0_30] : memref<8x30x128xf32, #tpu.memory_space<vmem>>, vector<1x30x128xf32>
    %38 = vector.shape_cast %37 : vector<1x30x128xf32> to vector<30x128xf32>
    %cst_31 = arith.constant dense<0.000000e+00> : vector<2x128xf32>
    %39 = tpu.matmul %36, %38, %cst_31 {dimension_numbers = #tpu.dot_dimension_numbers<[1], [0], [0], [1], [0, 0, 1, 1], [], []>} : vector<2x30xf32>, vector<30x128xf32>, vector<2x128xf32> -> vector<2x128xf32>
    %40 = arith.addf %10, %39 : vector<2x128xf32>
    %cst_32 = arith.constant 0.000000e+00 : f32
    %41 = vector.broadcast %cst_32 : f32 to vector<2x30xf32>
    %c1_33 = arith.constant 1 : index
    %c0_34 = arith.constant 0 : index
    %42 = memref.load %arg2[%c1_33, %c0_34] : memref<8x5xf32, #tpu.memory_space<smem>>
    %43 = vector.broadcast %42 : f32 to vector<2x30xf32>
    %44 = arith.mulf %43, %1 : vector<2x30xf32>
    %45 = arith.addf %41, %44 : vector<2x30xf32>
    %c1_35 = arith.constant 1 : index
    %c1_36 = arith.constant 1 : index
    %46 = memref.load %arg2[%c1_35, %c1_36] : memref<8x5xf32, #tpu.memory_space<smem>>
    %47 = vector.broadcast %46 : f32 to vector<2x30xf32>
    %48 = arith.mulf %47, %3 : vector<2x30xf32>
    %49 = arith.addf %45, %48 : vector<2x30xf32>
    %c1_37 = arith.constant 1 : index
    %c2_38 = arith.constant 2 : index
    %50 = memref.load %arg2[%c1_37, %c2_38] : memref<8x5xf32, #tpu.memory_space<smem>>
    %51 = vector.broadcast %50 : f32 to vector<2x30xf32>
    %52 = arith.mulf %51, %5 : vector<2x30xf32>
    %53 = arith.addf %49, %52 : vector<2x30xf32>
    %c1_39 = arith.constant 1 : index
    %c3_40 = arith.constant 3 : index
    %54 = memref.load %arg2[%c1_39, %c3_40] : memref<8x5xf32, #tpu.memory_space<smem>>
    %55 = vector.broadcast %54 : f32 to vector<2x30xf32>
    %56 = arith.mulf %55, %7 : vector<2x30xf32>
    %57 = arith.addf %53, %56 : vector<2x30xf32>
    %c1_41 = arith.constant 1 : index
    %c4_42 = arith.constant 4 : index
    %58 = memref.load %arg2[%c1_41, %c4_42] : memref<8x5xf32, #tpu.memory_space<smem>>
    %59 = vector.broadcast %58 : f32 to vector<2x30xf32>
    %60 = arith.mulf %59, %9 : vector<2x30xf32>
    %61 = arith.addf %57, %60 : vector<2x30xf32>
    %c1_43 = arith.constant 1 : index
    %62 = memref.load %arg3[%c1_43] : memref<8xf32, #tpu.memory_space<smem>>
    %63 = vector.broadcast %62 : f32 to vector<2x30xf32>
    %64 = arith.addf %61, %63 : vector<2x30xf32>
    %cst_44 = arith.constant 0.000000e+00 : f32
    %65 = vector.broadcast %cst_44 : f32 to vector<2x30xf32>
    %66 = arith.maximumf %64, %65 : vector<2x30xf32>
    %c1_45 = arith.constant 1 : index
    %c0_46 = arith.constant 0 : index
    %c0_47 = arith.constant 0 : index
    %67 = vector.load %arg4[%c1_45, %c0_46, %c0_47] : memref<8x30x128xf32, #tpu.memory_space<vmem>>, vector<1x30x128xf32>
    %68 = vector.shape_cast %67 : vector<1x30x128xf32> to vector<30x128xf32>
    %cst_48 = arith.constant dense<0.000000e+00> : vector<2x128xf32>
    %69 = tpu.matmul %66, %68, %cst_48 {dimension_numbers = #tpu.dot_dimension_numbers<[1], [0], [0], [1], [0, 0, 1, 1], [], []>} : vector<2x30xf32>, vector<30x128xf32>, vector<2x128xf32> -> vector<2x128xf32>
    %70 = arith.addf %40, %69 : vector<2x128xf32>
    %cst_49 = arith.constant 0.000000e+00 : f32
    %71 = vector.broadcast %cst_49 : f32 to vector<2x30xf32>
    %c2_50 = arith.constant 2 : index
    %c0_51 = arith.constant 0 : index
    %72 = memref.load %arg2[%c2_50, %c0_51] : memref<8x5xf32, #tpu.memory_space<smem>>
    %73 = vector.broadcast %72 : f32 to vector<2x30xf32>
    %74 = arith.mulf %73, %1 : vector<2x30xf32>
    %75 = arith.addf %71, %74 : vector<2x30xf32>
    %c2_52 = arith.constant 2 : index
    %c1_53 = arith.constant 1 : index
    %76 = memref.load %arg2[%c2_52, %c1_53] : memref<8x5xf32, #tpu.memory_space<smem>>
    %77 = vector.broadcast %76 : f32 to vector<2x30xf32>
    %78 = arith.mulf %77, %3 : vector<2x30xf32>
    %79 = arith.addf %75, %78 : vector<2x30xf32>
    %c2_54 = arith.constant 2 : index
    %c2_55 = arith.constant 2 : index
    %80 = memref.load %arg2[%c2_54, %c2_55] : memref<8x5xf32, #tpu.memory_space<smem>>
    %81 = vector.broadcast %80 : f32 to vector<2x30xf32>
    %82 = arith.mulf %81, %5 : vector<2x30xf32>
    %83 = arith.addf %79, %82 : vector<2x30xf32>
    %c2_56 = arith.constant 2 : index
    %c3_57 = arith.constant 3 : index
    %84 = memref.load %arg2[%c2_56, %c3_57] : memref<8x5xf32, #tpu.memory_space<smem>>
    %85 = vector.broadcast %84 : f32 to vector<2x30xf32>
    %86 = arith.mulf %85, %7 : vector<2x30xf32>
    %87 = arith.addf %83, %86 : vector<2x30xf32>
    %c2_58 = arith.constant 2 : index
    %c4_59 = arith.constant 4 : index
    %88 = memref.load %arg2[%c2_58, %c4_59] : memref<8x5xf32, #tpu.memory_space<smem>>
    %89 = vector.broadcast %88 : f32 to vector<2x30xf32>
    %90 = arith.mulf %89, %9 : vector<2x30xf32>
    %91 = arith.addf %87, %90 : vector<2x30xf32>
    %c2_60 = arith.constant 2 : index
    %92 = memref.load %arg3[%c2_60] : memref<8xf32, #tpu.memory_space<smem>>
    %93 = vector.broadcast %92 : f32 to vector<2x30xf32>
    %94 = arith.addf %91, %93 : vector<2x30xf32>
    %cst_61 = arith.constant 0.000000e+00 : f32
    %95 = vector.broadcast %cst_61 : f32 to vector<2x30xf32>
    %96 = arith.maximumf %94, %95 : vector<2x30xf32>
    %c2_62 = arith.constant 2 : index
    %c0_63 = arith.constant 0 : index
    %c0_64 = arith.constant 0 : index
    %97 = vector.load %arg4[%c2_62, %c0_63, %c0_64] : memref<8x30x128xf32, #tpu.memory_space<vmem>>, vector<1x30x128xf32>
    %98 = vector.shape_cast %97 : vector<1x30x128xf32> to vector<30x128xf32>
    %cst_65 = arith.constant dense<0.000000e+00> : vector<2x128xf32>
    %99 = tpu.matmul %96, %98, %cst_65 {dimension_numbers = #tpu.dot_dimension_numbers<[1], [0], [0], [1], [0, 0, 1, 1], [], []>} : vector<2x30xf32>, vector<30x128xf32>, vector<2x128xf32> -> vector<2x128xf32>
    %100 = arith.addf %70, %99 : vector<2x128xf32>
    %cst_66 = arith.constant 0.000000e+00 : f32
    %101 = vector.broadcast %cst_66 : f32 to vector<2x30xf32>
    %c3_67 = arith.constant 3 : index
    %c0_68 = arith.constant 0 : index
    %102 = memref.load %arg2[%c3_67, %c0_68] : memref<8x5xf32, #tpu.memory_space<smem>>
    %103 = vector.broadcast %102 : f32 to vector<2x30xf32>
    %104 = arith.mulf %103, %1 : vector<2x30xf32>
    %105 = arith.addf %101, %104 : vector<2x30xf32>
    %c3_69 = arith.constant 3 : index
    %c1_70 = arith.constant 1 : index
    %106 = memref.load %arg2[%c3_69, %c1_70] : memref<8x5xf32, #tpu.memory_space<smem>>
    %107 = vector.broadcast %106 : f32 to vector<2x30xf32>
    %108 = arith.mulf %107, %3 : vector<2x30xf32>
    %109 = arith.addf %105, %108 : vector<2x30xf32>
    %c3_71 = arith.constant 3 : index
    %c2_72 = arith.constant 2 : index
    %110 = memref.load %arg2[%c3_71, %c2_72] : memref<8x5xf32, #tpu.memory_space<smem>>
    %111 = vector.broadcast %110 : f32 to vector<2x30xf32>
    %112 = arith.mulf %111, %5 : vector<2x30xf32>
    %113 = arith.addf %109, %112 : vector<2x30xf32>
    %c3_73 = arith.constant 3 : index
    %c3_74 = arith.constant 3 : index
    %114 = memref.load %arg2[%c3_73, %c3_74] : memref<8x5xf32, #tpu.memory_space<smem>>
    %115 = vector.broadcast %114 : f32 to vector<2x30xf32>
    %116 = arith.mulf %115, %7 : vector<2x30xf32>
    %117 = arith.addf %113, %116 : vector<2x30xf32>
    %c3_75 = arith.constant 3 : index
    %c4_76 = arith.constant 4 : index
    %118 = memref.load %arg2[%c3_75, %c4_76] : memref<8x5xf32, #tpu.memory_space<smem>>
    %119 = vector.broadcast %118 : f32 to vector<2x30xf32>
    %120 = arith.mulf %119, %9 : vector<2x30xf32>
    %121 = arith.addf %117, %120 : vector<2x30xf32>
    %c3_77 = arith.constant 3 : index
    %122 = memref.load %arg3[%c3_77] : memref<8xf32, #tpu.memory_space<smem>>
    %123 = vector.broadcast %122 : f32 to vector<2x30xf32>
    %124 = arith.addf %121, %123 : vector<2x30xf32>
    %cst_78 = arith.constant 0.000000e+00 : f32
    %125 = vector.broadcast %cst_78 : f32 to vector<2x30xf32>
    %126 = arith.maximumf %124, %125 : vector<2x30xf32>
    %c3_79 = arith.constant 3 : index
    %c0_80 = arith.constant 0 : index
    %c0_81 = arith.constant 0 : index
    %127 = vector.load %arg4[%c3_79, %c0_80, %c0_81] : memref<8x30x128xf32, #tpu.memory_space<vmem>>, vector<1x30x128xf32>
    %128 = vector.shape_cast %127 : vector<1x30x128xf32> to vector<30x128xf32>
    %cst_82 = arith.constant dense<0.000000e+00> : vector<2x128xf32>
    %129 = tpu.matmul %126, %128, %cst_82 {dimension_numbers = #tpu.dot_dimension_numbers<[1], [0], [0], [1], [0, 0, 1, 1], [], []>} : vector<2x30xf32>, vector<30x128xf32>, vector<2x128xf32> -> vector<2x128xf32>
    %130 = arith.addf %100, %129 : vector<2x128xf32>
    %cst_83 = arith.constant 0.000000e+00 : f32
    %131 = vector.broadcast %cst_83 : f32 to vector<2x30xf32>
    %c4_84 = arith.constant 4 : index
    %c0_85 = arith.constant 0 : index
    %132 = memref.load %arg2[%c4_84, %c0_85] : memref<8x5xf32, #tpu.memory_space<smem>>
    %133 = vector.broadcast %132 : f32 to vector<2x30xf32>
    %134 = arith.mulf %133, %1 : vector<2x30xf32>
    %135 = arith.addf %131, %134 : vector<2x30xf32>
    %c4_86 = arith.constant 4 : index
    %c1_87 = arith.constant 1 : index
    %136 = memref.load %arg2[%c4_86, %c1_87] : memref<8x5xf32, #tpu.memory_space<smem>>
    %137 = vector.broadcast %136 : f32 to vector<2x30xf32>
    %138 = arith.mulf %137, %3 : vector<2x30xf32>
    %139 = arith.addf %135, %138 : vector<2x30xf32>
    %c4_88 = arith.constant 4 : index
    %c2_89 = arith.constant 2 : index
    %140 = memref.load %arg2[%c4_88, %c2_89] : memref<8x5xf32, #tpu.memory_space<smem>>
    %141 = vector.broadcast %140 : f32 to vector<2x30xf32>
    %142 = arith.mulf %141, %5 : vector<2x30xf32>
    %143 = arith.addf %139, %142 : vector<2x30xf32>
    %c4_90 = arith.constant 4 : index
    %c3_91 = arith.constant 3 : index
    %144 = memref.load %arg2[%c4_90, %c3_91] : memref<8x5xf32, #tpu.memory_space<smem>>
    %145 = vector.broadcast %144 : f32 to vector<2x30xf32>
    %146 = arith.mulf %145, %7 : vector<2x30xf32>
    %147 = arith.addf %143, %146 : vector<2x30xf32>
    %c4_92 = arith.constant 4 : index
    %c4_93 = arith.constant 4 : index
    %148 = memref.load %arg2[%c4_92, %c4_93] : memref<8x5xf32, #tpu.memory_space<smem>>
    %149 = vector.broadcast %148 : f32 to vector<2x30xf32>
    %150 = arith.mulf %149, %9 : vector<2x30xf32>
    %151 = arith.addf %147, %150 : vector<2x30xf32>
    %c4_94 = arith.constant 4 : index
    %152 = memref.load %arg3[%c4_94] : memref<8xf32, #tpu.memory_space<smem>>
    %153 = vector.broadcast %152 : f32 to vector<2x30xf32>
    %154 = arith.addf %151, %153 : vector<2x30xf32>
    %cst_95 = arith.constant 0.000000e+00 : f32
    %155 = vector.broadcast %cst_95 : f32 to vector<2x30xf32>
    %156 = arith.maximumf %154, %155 : vector<2x30xf32>
    %c4_96 = arith.constant 4 : index
    %c0_97 = arith.constant 0 : index
    %c0_98 = arith.constant 0 : index
    %157 = vector.load %arg4[%c4_96, %c0_97, %c0_98] : memref<8x30x128xf32, #tpu.memory_space<vmem>>, vector<1x30x128xf32>
    %158 = vector.shape_cast %157 : vector<1x30x128xf32> to vector<30x128xf32>
    %cst_99 = arith.constant dense<0.000000e+00> : vector<2x128xf32>
    %159 = tpu.matmul %156, %158, %cst_99 {dimension_numbers = #tpu.dot_dimension_numbers<[1], [0], [0], [1], [0, 0, 1, 1], [], []>} : vector<2x30xf32>, vector<30x128xf32>, vector<2x128xf32> -> vector<2x128xf32>
    %160 = arith.addf %130, %159 : vector<2x128xf32>
    %cst_100 = arith.constant 0.000000e+00 : f32
    %161 = vector.broadcast %cst_100 : f32 to vector<2x30xf32>
    %c5 = arith.constant 5 : index
    %c0_101 = arith.constant 0 : index
    %162 = memref.load %arg2[%c5, %c0_101] : memref<8x5xf32, #tpu.memory_space<smem>>
    %163 = vector.broadcast %162 : f32 to vector<2x30xf32>
    %164 = arith.mulf %163, %1 : vector<2x30xf32>
    %165 = arith.addf %161, %164 : vector<2x30xf32>
    %c5_102 = arith.constant 5 : index
    %c1_103 = arith.constant 1 : index
    %166 = memref.load %arg2[%c5_102, %c1_103] : memref<8x5xf32, #tpu.memory_space<smem>>
    %167 = vector.broadcast %166 : f32 to vector<2x30xf32>
    %168 = arith.mulf %167, %3 : vector<2x30xf32>
    %169 = arith.addf %165, %168 : vector<2x30xf32>
    %c5_104 = arith.constant 5 : index
    %c2_105 = arith.constant 2 : index
    %170 = memref.load %arg2[%c5_104, %c2_105] : memref<8x5xf32, #tpu.memory_space<smem>>
    %171 = vector.broadcast %170 : f32 to vector<2x30xf32>
    %172 = arith.mulf %171, %5 : vector<2x30xf32>
    %173 = arith.addf %169, %172 : vector<2x30xf32>
    %c5_106 = arith.constant 5 : index
    %c3_107 = arith.constant 3 : index
    %174 = memref.load %arg2[%c5_106, %c3_107] : memref<8x5xf32, #tpu.memory_space<smem>>
    %175 = vector.broadcast %174 : f32 to vector<2x30xf32>
    %176 = arith.mulf %175, %7 : vector<2x30xf32>
    %177 = arith.addf %173, %176 : vector<2x30xf32>
    %c5_108 = arith.constant 5 : index
    %c4_109 = arith.constant 4 : index
    %178 = memref.load %arg2[%c5_108, %c4_109] : memref<8x5xf32, #tpu.memory_space<smem>>
    %179 = vector.broadcast %178 : f32 to vector<2x30xf32>
    %180 = arith.mulf %179, %9 : vector<2x30xf32>
    %181 = arith.addf %177, %180 : vector<2x30xf32>
    %c5_110 = arith.constant 5 : index
    %182 = memref.load %arg3[%c5_110] : memref<8xf32, #tpu.memory_space<smem>>
    %183 = vector.broadcast %182 : f32 to vector<2x30xf32>
    %184 = arith.addf %181, %183 : vector<2x30xf32>
    %cst_111 = arith.constant 0.000000e+00 : f32
    %185 = vector.broadcast %cst_111 : f32 to vector<2x30xf32>
    %186 = arith.maximumf %184, %185 : vector<2x30xf32>
    %c5_112 = arith.constant 5 : index
    %c0_113 = arith.constant 0 : index
    %c0_114 = arith.constant 0 : index
    %187 = vector.load %arg4[%c5_112, %c0_113, %c0_114] : memref<8x30x128xf32, #tpu.memory_space<vmem>>, vector<1x30x128xf32>
    %188 = vector.shape_cast %187 : vector<1x30x128xf32> to vector<30x128xf32>
    %cst_115 = arith.constant dense<0.000000e+00> : vector<2x128xf32>
    %189 = tpu.matmul %186, %188, %cst_115 {dimension_numbers = #tpu.dot_dimension_numbers<[1], [0], [0], [1], [0, 0, 1, 1], [], []>} : vector<2x30xf32>, vector<30x128xf32>, vector<2x128xf32> -> vector<2x128xf32>
    %190 = arith.addf %160, %189 : vector<2x128xf32>
    %cst_116 = arith.constant 0.000000e+00 : f32
    %191 = vector.broadcast %cst_116 : f32 to vector<2x30xf32>
    %c6 = arith.constant 6 : index
    %c0_117 = arith.constant 0 : index
    %192 = memref.load %arg2[%c6, %c0_117] : memref<8x5xf32, #tpu.memory_space<smem>>
    %193 = vector.broadcast %192 : f32 to vector<2x30xf32>
    %194 = arith.mulf %193, %1 : vector<2x30xf32>
    %195 = arith.addf %191, %194 : vector<2x30xf32>
    %c6_118 = arith.constant 6 : index
    %c1_119 = arith.constant 1 : index
    %196 = memref.load %arg2[%c6_118, %c1_119] : memref<8x5xf32, #tpu.memory_space<smem>>
    %197 = vector.broadcast %196 : f32 to vector<2x30xf32>
    %198 = arith.mulf %197, %3 : vector<2x30xf32>
    %199 = arith.addf %195, %198 : vector<2x30xf32>
    %c6_120 = arith.constant 6 : index
    %c2_121 = arith.constant 2 : index
    %200 = memref.load %arg2[%c6_120, %c2_121] : memref<8x5xf32, #tpu.memory_space<smem>>
    %201 = vector.broadcast %200 : f32 to vector<2x30xf32>
    %202 = arith.mulf %201, %5 : vector<2x30xf32>
    %203 = arith.addf %199, %202 : vector<2x30xf32>
    %c6_122 = arith.constant 6 : index
    %c3_123 = arith.constant 3 : index
    %204 = memref.load %arg2[%c6_122, %c3_123] : memref<8x5xf32, #tpu.memory_space<smem>>
    %205 = vector.broadcast %204 : f32 to vector<2x30xf32>
    %206 = arith.mulf %205, %7 : vector<2x30xf32>
    %207 = arith.addf %203, %206 : vector<2x30xf32>
    %c6_124 = arith.constant 6 : index
    %c4_125 = arith.constant 4 : index
    %208 = memref.load %arg2[%c6_124, %c4_125] : memref<8x5xf32, #tpu.memory_space<smem>>
    %209 = vector.broadcast %208 : f32 to vector<2x30xf32>
    %210 = arith.mulf %209, %9 : vector<2x30xf32>
    %211 = arith.addf %207, %210 : vector<2x30xf32>
    %c6_126 = arith.constant 6 : index
    %212 = memref.load %arg3[%c6_126] : memref<8xf32, #tpu.memory_space<smem>>
    %213 = vector.broadcast %212 : f32 to vector<2x30xf32>
    %214 = arith.addf %211, %213 : vector<2x30xf32>
    %cst_127 = arith.constant 0.000000e+00 : f32
    %215 = vector.broadcast %cst_127 : f32 to vector<2x30xf32>
    %216 = arith.maximumf %214, %215 : vector<2x30xf32>
    %c6_128 = arith.constant 6 : index
    %c0_129 = arith.constant 0 : index
    %c0_130 = arith.constant 0 : index
    %217 = vector.load %arg4[%c6_128, %c0_129, %c0_130] : memref<8x30x128xf32, #tpu.memory_space<vmem>>, vector<1x30x128xf32>
    %218 = vector.shape_cast %217 : vector<1x30x128xf32> to vector<30x128xf32>
    %cst_131 = arith.constant dense<0.000000e+00> : vector<2x128xf32>
    %219 = tpu.matmul %216, %218, %cst_131 {dimension_numbers = #tpu.dot_dimension_numbers<[1], [0], [0], [1], [0, 0, 1, 1], [], []>} : vector<2x30xf32>, vector<30x128xf32>, vector<2x128xf32> -> vector<2x128xf32>
    %220 = arith.addf %190, %219 : vector<2x128xf32>
    %cst_132 = arith.constant 0.000000e+00 : f32
    %221 = vector.broadcast %cst_132 : f32 to vector<2x30xf32>
    %c7 = arith.constant 7 : index
    %c0_133 = arith.constant 0 : index
    %222 = memref.load %arg2[%c7, %c0_133] : memref<8x5xf32, #tpu.memory_space<smem>>
    %223 = vector.broadcast %222 : f32 to vector<2x30xf32>
    %224 = arith.mulf %223, %1 : vector<2x30xf32>
    %225 = arith.addf %221, %224 : vector<2x30xf32>
    %c7_134 = arith.constant 7 : index
    %c1_135 = arith.constant 1 : index
    %226 = memref.load %arg2[%c7_134, %c1_135] : memref<8x5xf32, #tpu.memory_space<smem>>
    %227 = vector.broadcast %226 : f32 to vector<2x30xf32>
    %228 = arith.mulf %227, %3 : vector<2x30xf32>
    %229 = arith.addf %225, %228 : vector<2x30xf32>
    %c7_136 = arith.constant 7 : index
    %c2_137 = arith.constant 2 : index
    %230 = memref.load %arg2[%c7_136, %c2_137] : memref<8x5xf32, #tpu.memory_space<smem>>
    %231 = vector.broadcast %230 : f32 to vector<2x30xf32>
    %232 = arith.mulf %231, %5 : vector<2x30xf32>
    %233 = arith.addf %229, %232 : vector<2x30xf32>
    %c7_138 = arith.constant 7 : index
    %c3_139 = arith.constant 3 : index
    %234 = memref.load %arg2[%c7_138, %c3_139] : memref<8x5xf32, #tpu.memory_space<smem>>
    %235 = vector.broadcast %234 : f32 to vector<2x30xf32>
    %236 = arith.mulf %235, %7 : vector<2x30xf32>
    %237 = arith.addf %233, %236 : vector<2x30xf32>
    %c7_140 = arith.constant 7 : index
    %c4_141 = arith.constant 4 : index
    %238 = memref.load %arg2[%c7_140, %c4_141] : memref<8x5xf32, #tpu.memory_space<smem>>
    %239 = vector.broadcast %238 : f32 to vector<2x30xf32>
    %240 = arith.mulf %239, %9 : vector<2x30xf32>
    %241 = arith.addf %237, %240 : vector<2x30xf32>
    %c7_142 = arith.constant 7 : index
    %242 = memref.load %arg3[%c7_142] : memref<8xf32, #tpu.memory_space<smem>>
    %243 = vector.broadcast %242 : f32 to vector<2x30xf32>
    %244 = arith.addf %241, %243 : vector<2x30xf32>
    %cst_143 = arith.constant 0.000000e+00 : f32
    %245 = vector.broadcast %cst_143 : f32 to vector<2x30xf32>
    %246 = arith.maximumf %244, %245 : vector<2x30xf32>
    %c7_144 = arith.constant 7 : index
    %c0_145 = arith.constant 0 : index
    %c0_146 = arith.constant 0 : index
    %247 = vector.load %arg4[%c7_144, %c0_145, %c0_146] : memref<8x30x128xf32, #tpu.memory_space<vmem>>, vector<1x30x128xf32>
    %248 = vector.shape_cast %247 : vector<1x30x128xf32> to vector<30x128xf32>
    %cst_147 = arith.constant dense<0.000000e+00> : vector<2x128xf32>
    %249 = tpu.matmul %246, %248, %cst_147 {dimension_numbers = #tpu.dot_dimension_numbers<[1], [0], [0], [1], [0, 0, 1, 1], [], []>} : vector<2x30xf32>, vector<30x128xf32>, vector<2x128xf32> -> vector<2x128xf32>
    %250 = arith.addf %220, %249 : vector<2x128xf32>
    %c0_148 = arith.constant 0 : index
    %c0_149 = arith.constant 0 : index
    %251 = vector.load %arg5[%c0_148, %c0_149] : memref<1x128xf32, #tpu.memory_space<vmem>>, vector<1x128xf32>
    %252 = vector.broadcast %251 : vector<1x128xf32> to vector<2x128xf32>
    %253 = arith.addf %250, %252 : vector<2x128xf32>
    %cst_150 = arith.constant dense<0xFF800000> : vector<2xf32>
    %254 = vector.multi_reduction <maximumf>, %253, %cst_150 [1] : vector<2x128xf32> to vector<2xf32>
    %255 = vector.shape_cast %254 : vector<2xf32> to vector<2x1xf32>
    %256 = vector.broadcast %255 : vector<2x1xf32> to vector<2x128xf32>
    %257 = arith.subf %253, %256 : vector<2x128xf32>
    %258 = math.exp %257 : vector<2x128xf32>
    %cst_151 = arith.constant dense<0.000000e+00> : vector<2xf32>
    %259 = vector.multi_reduction <add>, %258, %cst_151 [1] : vector<2x128xf32> to vector<2xf32>
    %260 = vector.shape_cast %259 : vector<2xf32> to vector<2x1xf32>
    %261 = tpu.reciprocal %260 {approx = true} : vector<2x1xf32> -> vector<2x1xf32>
    %262 = vector.broadcast %261 : vector<2x1xf32> to vector<2x128xf32>
    %263 = arith.mulf %258, %262 : vector<2x128xf32>
    %c0_152 = arith.constant 0 : index
    %c0_153 = arith.constant 0 : index
    %264 = vector.load %arg6[%c0_152, %c0_153] : memref<2x128xf32, #tpu.memory_space<vmem>>, vector<2x128xf32>
    tpu.vector_store %arg6[%c0_152, %c0_153], %263 {strides = array<i32>} : memref<2x128xf32, #tpu.memory_space<vmem>>, vector<2x128xf32>,
    return
  }
  func.func @transform_0(%arg0: i32) -> (i32, i32, i32, i32) {
    %c0_i32 = arith.constant 0 : i32
    %c0_i32_0 = arith.constant 0 : i32
    %c0_i32_1 = arith.constant 0 : i32
    %c0_i32_2 = arith.constant 0 : i32
    return %c0_i32, %c0_i32_0, %arg0, %c0_i32_1 : i32, i32, i32, i32
  }
  func.func @transform_1(%arg0: i32) -> (i32, i32) {
    %c0_i32 = arith.constant 0 : i32
    %c0_i32_0 = arith.constant 0 : i32
    %c0_i32_1 = arith.constant 0 : i32
    return %c0_i32, %c0_i32_0 : i32, i32
  }
  func.func @transform_2(%arg0: i32) -> i32 {
    %c0_i32 = arith.constant 0 : i32
    %c0_i32_0 = arith.constant 0 : i32
    return %c0_i32 : i32
  }
  func.func @transform_3(%arg0: i32) -> (i32, i32, i32) {
    %c0_i32 = arith.constant 0 : i32
    %c0_i32_0 = arith.constant 0 : i32
    %c0_i32_1 = arith.constant 0 : i32
    %c0_i32_2 = arith.constant 0 : i32
    return %c0_i32, %c0_i32_0, %c0_i32_1 : i32, i32, i32
  }
  func.func @transform_4(%arg0: i32) -> (i32, i32) {
    %c0_i32 = arith.constant 0 : i32
    %c0_i32_0 = arith.constant 0 : i32
    %c0_i32_1 = arith.constant 0 : i32
    return %c0_i32, %c0_i32_0 : i32, i32
  }
  func.func @transform_5(%arg0: i32) -> (i32, i32) {
    %c0_i32 = arith.constant 0 : i32
    %c0_i32_0 = arith.constant 0 : i32
    return %arg0, %c0_i32 : i32, i32
  }
}

</mosaic_0001>

<llo_original>
// kernel: net_forward.1
$region0: #{net_forward.1}
  #allocation0 [shape = 'u32[]', space=smem, size = 0x4, offset = 0x4, fixed_abs, tag = 'smem constant byte address 0x4 - core index']
  #allocation1 [shape = 'u32[144,128]{1,0:T(1,128)}', space=vmem, size = 0x12000, scoped, tag = 'internal scratch']
  %s0 = inlined_call_operand.vmem [shape: f32[1,2,2,32], index: 0, kind: input, shape index: {}]
  %s1 = inlined_call_operand.vmem [shape: f32[8,5], index: 1, kind: input, shape index: {}]
  %s2 = inlined_call_operand.vmem [shape: f32[8], index: 2, kind: input, shape index: {}]
  %s3 = inlined_call_operand.vmem [shape: f32[8,30,128], index: 3, kind: input, shape index: {}]
  %s4 = inlined_call_operand.vmem [shape: f32[1,128], index: 4, kind: input, shape index: {}]
  %s5 = inlined_call_operand.hbm [shape: f32[2,128], index: 5, kind: output, shape index: {}]
  %s6 = sld [smem:[#allocation0]]
  $region38: #{net_forward.1} parent=0
    _
  %s8 = ssub.s32 1, %s6
  %s9 = scalar_select 0, %s8, %s6
  $region1: #{net_forward.1} parent=0
    #allocation2 [shape = 'u8[4096]{0}', space=smem, size = 0x1000, scoped, tag = 'input window, operand 1, single buffered']
    #allocation3 [shape = 's32[1]{0}', space=sflag, size = 0x4, scoped, tag = 'scoped memory for net_forward.1']
    #allocation4 [shape = 's32[1]{0}', space=sflag, size = 0x4, scoped, tag = 'scoped memory for net_forward.1']
    #allocation5 [shape = 'u8[512]{0}', space=smem, size = 0x200, scoped, tag = 'input window, operand 2, single buffered']
    #allocation6 [shape = 's32[1]{0}', space=sflag, size = 0x4, scoped, tag = 'scoped memory for net_forward.1']
    #allocation7 [shape = 'u8[1024]{0}', space=vmem, size = 0x400, scoped, tag = 'output window, operand 0, single buffered']
    %10 = vsyncpa [#allocation4], 0
    %11 = vsyncpa [#allocation6], 0
    %12 = vsyncpa [#allocation3], 0
    // Predicated region
    $region2: #{net_forward.1} parent=1 // pred_check
      _
    $region3: #{net_forward.1} parent=1 // pred_check_branch
      %14 = sbr.rel (0) target = $region5
    $region4: #{net_forward.1} parent=1 // pred_region
      _
    $region5: #{net_forward.1} parent=1 // pred_fallthru
      _
    // Predicated region
    $region6: #{net_forward.1} parent=1 // pred_check
      _
    $region7: #{net_forward.1} parent=1 // pred_check_branch
      %16 = sbr.rel (0) target = $region9
    $region8: #{net_forward.1} parent=1 // pred_region
      %s18 = ssub.s32 128, 128
      %19 = vsyncadd [#allocation4], %s18
      %s21 = sshll.u32 %s1, 4
      %s22 = int_to_ptr.vmem [resolvable:$true] %s21
      %24 = dma.vmem_to_smem %s22, 128, [#allocation2], [#allocation4]
    $region9: #{net_forward.1} parent=1 // pred_fallthru
      _
    // Predicated region
    $region10: #{net_forward.1} parent=1 // pred_check
      _
    $region11: #{net_forward.1} parent=1 // pred_check_branch
      %26 = sbr.rel (0) target = $region13
    $region12: #{net_forward.1} parent=1 // pred_region
      %s28 = ssub.s32 16, 16
      %29 = vsyncadd [#allocation6], %s28
      %s31 = sshll.u32 %s2, 4
      %s32 = int_to_ptr.vmem [resolvable:$true] %s31
      %34 = dma.vmem_to_smem %s32, 16, [#allocation5], [#allocation6]
    $region13: #{net_forward.1} parent=1 // pred_fallthru
      _
    // Predicated region
    $region14: #{net_forward.1} parent=1 // pred_check
      _
    $region15: #{net_forward.1} parent=1 // pred_check_branch
      %36 = sbr.rel (0) target = $region17
    $region16: #{net_forward.1} parent=1 // pred_region
      _
    $region17: #{net_forward.1} parent=1 // pred_fallthru
      _
    // Predicated region
    $region18: #{net_forward.1} parent=1 // pred_check
      _
    $region19: #{net_forward.1} parent=1 // pred_check_branch
      %38 = sbr.rel (0) target = $region21
    $region20: #{net_forward.1} parent=1 // pred_region
      _
    $region21: #{net_forward.1} parent=1 // pred_fallthru
      _
    // Predicated region
    $region22: #{net_forward.1} parent=1 // pred_check
      _
    $region23: #{net_forward.1} parent=1 // pred_check_branch
      %40 = sbr.rel (0) target = $region25
    $region24: #{net_forward.1} parent=1 // pred_region
      %41 = dma.done [#allocation4], 128
    $region25: #{net_forward.1} parent=1 // pred_fallthru
      _
    // Predicated region
    $region26: #{net_forward.1} parent=1 // pred_check
      _
    $region27: #{net_forward.1} parent=1 // pred_check_branch
      %43 = sbr.rel (0) target = $region29
    $region28: #{net_forward.1} parent=1 // pred_region
      %44 = dma.done [#allocation6], 16
    $region29: #{net_forward.1} parent=1 // pred_fallthru
      _
    %45 = sfence
    %v46 = vld [vmem:[%s0] sm:$0x3]
    %s47 = scalar_lea.vmem %s0, 2
    %v48 = vld [vmem:[%s47] sm:$0x3]
    %s49 = sld [smem:[#allocation2]]
    %v50 = vstv %s49
    %v51 = vmul.f32 %v50, %v46
    %v52 = vadd.f32 %v51, 0.0
    %s53 = sld [smem:[#allocation2 + $0x1]]
    %v54 = vstv %s53
    %v55 = vmul.f32 %v54, %v48
    %v56 = vadd.f32 %v52, %v55
    %s57 = sld [smem:[#allocation2 + $0x2]]
    %v58 = vstv %s57
    %v59 = vmul.f32 %v58, %v46
    %61 = vrot.lane.b32.xlu0 %v59, 127
    %v62 = vpop.permute.xlu0 %61
    %v64 = vadd.f32 %v56, %v62
    %s65 = sld [smem:[#allocation2 + $0x3]]
    %v66 = vstv %s65
    %v67 = vmul.f32 %v66, %v48
    %69 = vrot.lane.b32.xlu0 %v67, 127
    %v70 = vpop.permute.xlu0 %69
    %v72 = vadd.f32 %v64, %v70
    %s73 = sld [smem:[#allocation2 + $0x4]]
    %v74 = vstv %s73
    %v75 = vmul.f32 %v74, %v46
    %77 = vrot.lane.b32.xlu0 %v75, 126
    %v78 = vpop.permute.xlu0 %77
    %v80 = vadd.f32 %v72, %v78
    %s81 = sld [smem:[#allocation5]]
    %v82 = vstv %s81
    %v83 = vadd.f32 %v80, %v82
    %v84 = vmax.f32 %v83, 0.0
    %v85 = vld [vmem:[%s3] sm:$0xff]
    %v86 = vld [vmem:[%s3 + $0x8] sm:$0xff]
    %v87 = vld [vmem:[%s3 + $0x10] sm:$0xff]
    %v88 = vld [vmem:[%s3 + $0x18] sm:$0x3f]
    %s89 = sld [smem:[#allocation2 + $0x80]]
    %v90 = vstv %s89
    %v91 = vmul.f32 %v90, %v46
    %v92 = vadd.f32 %v91, 0.0
    %s93 = sld [smem:[#allocation2 + $0x81]]
    %v94 = vstv %s93
    %v95 = vmul.f32 %v94, %v48
    %v96 = vadd.f32 %v92, %v95
    %s97 = sld [smem:[#allocation2 + $0x82]]
    %v98 = vstv %s97
    %v99 = vmul.f32 %v98, %v46
    %101 = vrot.lane.b32.xlu0 %v99, 127
    %v102 = vpop.permute.xlu0 %101
    %v104 = vadd.f32 %v96, %v102
    %s105 = sld [smem:[#allocation2 + $0x83]]
    %v106 = vstv %s105
    %v107 = vmul.f32 %v106, %v48
    %109 = vrot.lane.b32.xlu0 %v107, 127
    %v110 = vpop.permute.xlu0 %109
    %v112 = vadd.f32 %v104, %v110
    %s113 = sld [smem:[#allocation2 + $0x84]]
    %v114 = vstv %s113
    %v115 = vmul.f32 %v114, %v46
    %117 = vrot.lane.b32.xlu0 %v115, 126
    %v118 = vpop.permute.xlu0 %117
    %v120 = vadd.f32 %v112, %v118
    %s121 = sld [smem:[#allocation5 + $0x1]]
    %v122 = vstv %s121
    %v123 = vadd.f32 %v120, %v122
    %v124 = vmax.f32 %v123, 0.0
    %s125 = scalar_lea.vmem %s3, 32
    %v126 = vld [vmem:[%s125] sm:$0xff]
    %v127 = vld [vmem:[%s125 + $0x8] sm:$0xff]
    %v128 = vld [vmem:[%s125 + $0x10] sm:$0xff]
    %v129 = vld [vmem:[%s125 + $0x18] sm:$0x3f]
    %vm130 = vcmask 244736
    %v132 = vsel %vm130, %v124, 0
    %vm134 = vcmask 1045504
    %v136 = vsel %vm134, %v129, 0
    %138 = vmatprep.subr.mxu0 0.0
    %139 = vmatpush1.msra.mxu0 %v126
    %140 = vmatprep.subr.mxu0 0.0
    %141 = vmatpush1.msra.mxu0 %v127
    %142 = vmatprep.subr.mxu0 0.0
    %143 = vmatpush1.msra.mxu0 %v128
    %144 = vmatprep.subr.mxu0 0.0
    %145 = vmatpush1.msra.mxu0 %v136
    %146 = vmatprep.subr.mxu0 0.0
    %147 = vmatpush1.msra.mxu0 0.0
    %148 = vmatprep.subr.mxu0 0.0
    %149 = vmatpush1.msra.mxu0 0.0
    %150 = vmatprep.subr.mxu0 0.0
    %151 = vmatpush1.msra.mxu0 0.0
    %152 = vmatprep.subr.mxu0 0.0
    %153 = vmatpush1.msra.mxu0 0.0
    %154 = vmatprep.subr.mxu0 0.0
    %155 = vmatpush1.msra.mxu0 0.0
    %156 = vmatprep.subr.mxu0 0.0
    %157 = vmatpush1.msra.mxu0 0.0
    %158 = vmatprep.subr.mxu0 0.0
    %159 = vmatpush1.msra.mxu0 0.0
    %160 = vmatprep.subr.mxu0 0.0
    %161 = vmatpush1.msra.mxu0 0.0
    %162 = vmatprep.subr.mxu0 0.0
    %163 = vmatpush1.msra.mxu0 0.0
    %164 = vmatprep.subr.mxu0 0.0
    %165 = vmatpush1.msra.mxu0 0.0
    %166 = vmatprep.subr.mxu0 0.0
    %167 = vmatpush1.msra.mxu0 0.0
    %168 = vmatprep.subr.mxu0 0.0
    %169 = vmatpush1.msra.mxu0 0.0
    %170 = vmatprep.subr.mxu0 0.0
    %171 = vmatpush1.msra.mxu0 0.0
    %172 = vmatprep.subr.mxu0 0.0
    %173 = vmatpush1.msra.mxu0 0.0
    %174 = vmatprep.subr.mxu0 0.0
    %175 = vmatpush1.msra.mxu0 0.0
    %176 = vmatprep.subr.mxu0 0.0
    %177 = vmatpush1.msra.mxu0 0.0
    %178 = vmatprep.subr.mxu0 0.0
    %179 = vmatpush1.msra.mxu0 0.0
    %180 = vmatprep.subr.mxu0 0.0
    %181 = vmatpush1.msra.mxu0 0.0
    %182 = vmatprep.subr.mxu0 0.0
    %183 = vmatpush1.msra.mxu0 0.0
    %184 = vmatprep.subr.mxu0 0.0
    %185 = vmatpush1.msra.mxu0 0.0
    %186 = vmatprep.subr.mxu0 0.0
    %187 = vmatpush1.msra.mxu0 0.0
    %188 = vmatprep.subr.mxu0 0.0
    %189 = vmatpush1.msra.mxu0 0.0
    %190 = vmatprep.subr.mxu0 0.0
    %191 = vmatpush1.msra.mxu0 0.0
    %192 = vmatprep.subr.mxu0 0.0
    %193 = vmatpush1.msra.mxu0 0.0
    %194 = vmatprep.subr.mxu0 0.0
    %195 = vmatpush1.msra.mxu0 0.0
    %196 = vmatprep.subr.mxu0 0.0
    %197 = vmatpush1.msra.mxu0 0.0
    %198 = vmatprep.subr.mxu0 0.0
    %199 = vmatpush1.msra.mxu0 0.0
    %200 = vmatprep.subr.mxu0 0.0
    %201 = vmatpush1.msra.mxu0 0.0
    %202 = vmatprep.mubr.f32.mxu0 0.0
    %203 = vmatmul.mubr.f32.gmra.mrb[0].mxu0 %v132
    %v204 = vpop.f32.mrb[0].mxu0
    %v205 = vadd.f32 0.0, %v204
    %v206 = vpop.f32.mrb[0].mxu0
    %207 = vdwg.mxu0
    %v209 = vsel %vm130, %v84, 0
    %v212 = vsel %vm134, %v88, 0
    %214 = vmatprep.subr.mxu0 0.0
    %215 = vmatpush1.msra.mxu0 %v85
    %216 = vmatprep.subr.mxu0 0.0
    %217 = vmatpush1.msra.mxu0 %v86
    %218 = vmatprep.subr.mxu0 0.0
    %219 = vmatpush1.msra.mxu0 %v87
    %220 = vmatprep.subr.mxu0 0.0
    %221 = vmatpush1.msra.mxu0 %v212
    %222 = vmatprep.subr.mxu0 0.0
    %223 = vmatpush1.msra.mxu0 0.0
    %224 = vmatprep.subr.mxu0 0.0
    %225 = vmatpush1.msra.mxu0 0.0
    %226 = vmatprep.subr.mxu0 0.0
    %227 = vmatpush1.msra.mxu0 0.0
    %228 = vmatprep.subr.mxu0 0.0
    %229 = vmatpush1.msra.mxu0 0.0
    %230 = vmatprep.subr.mxu0 0.0
    %231 = vmatpush1.msra.mxu0 0.0
    %232 = vmatprep.subr.mxu0 0.0
    %233 = vmatpush1.msra.mxu0 0.0
    %234 = vmatprep.subr.mxu0 0.0
    %235 = vmatpush1.msra.mxu0 0.0
    %236 = vmatprep.subr.mxu0 0.0
    %237 = vmatpush1.msra.mxu0 0.0
    %238 = vmatprep.subr.mxu0 0.0
    %239 = vmatpush1.msra.mxu0 0.0
    %240 = vmatprep.subr.mxu0 0.0
    %241 = vmatpush1.msra.mxu0 0.0
    %242 = vmatprep.subr.mxu0 0.0
    %243 = vmatpush1.msra.mxu0 0.0
    %244 = vmatprep.subr.mxu0 0.0
    %245 = vmatpush1.msra.mxu0 0.0
    %246 = vmatprep.subr.mxu0 0.0
    %247 = vmatpush1.msra.mxu0 0.0
    %248 = vmatprep.subr.mxu0 0.0
    %249 = vmatpush1.msra.mxu0 0.0
    %250 = vmatprep.subr.mxu0 0.0
    %251 = vmatpush1.msra.mxu0 0.0
    %252 = vmatprep.subr.mxu0 0.0
    %253 = vmatpush1.msra.mxu0 0.0
    %254 = vmatprep.subr.mxu0 0.0
    %255 = vmatpush1.msra.mxu0 0.0
    %256 = vmatprep.subr.mxu0 0.0
    %257 = vmatpush1.msra.mxu0 0.0
    %258 = vmatprep.subr.mxu0 0.0
    %259 = vmatpush1.msra.mxu0 0.0
    %260 = vmatprep.subr.mxu0 0.0
    %261 = vmatpush1.msra.mxu0 0.0
    %262 = vmatprep.subr.mxu0 0.0
    %263 = vmatpush1.msra.mxu0 0.0
    %264 = vmatprep.subr.mxu0 0.0
    %265 = vmatpush1.msra.mxu0 0.0
    %266 = vmatprep.subr.mxu0 0.0
    %267 = vmatpush1.msra.mxu0 0.0
    %268 = vmatprep.subr.mxu0 0.0
    %269 = vmatpush1.msra.mxu0 0.0
    %270 = vmatprep.subr.mxu0 0.0
    %271 = vmatpush1.msra.mxu0 0.0
    %272 = vmatprep.subr.mxu0 0.0
    %273 = vmatpush1.msra.mxu0 0.0
    %274 = vmatprep.subr.mxu0 0.0
    %275 = vmatpush1.msra.mxu0 0.0
    %276 = vmatprep.subr.mxu0 0.0
    %277 = vmatpush1.msra.mxu0 0.0
    %278 = vmatprep.mubr.f32.mxu0 0.0
    %279 = vmatmul.mubr.f32.gmra.mrb[0].mxu0 %v209
    %v280 = vpop.f32.mrb[0].mxu0
    %v281 = vadd.f32 %v205, %v280
    %v282 = vpop.f32.mrb[0].mxu0
    %283 = vdwg.mxu0
    %s284 = sld [smem:[#allocation2 + $0x100]]
    %v285 = vstv %s284
    %v286 = vmul.f32 %v285, %v46
    %v287 = vadd.f32 %v286, 0.0
    %s288 = sld [smem:[#allocation2 + $0x101]]
    %v289 = vstv %s288
    %v290 = vmul.f32 %v289, %v48
    %v291 = vadd.f32 %v287, %v290
    %s292 = sld [smem:[#allocation2 + $0x102]]
    %v293 = vstv %s292
    %v294 = vmul.f32 %v293, %v46
    %296 = vrot.lane.b32.xlu0 %v294, 127
    %v297 = vpop.permute.xlu0 %296
    %v299 = vadd.f32 %v291, %v297
    %s300 = sld [smem:[#allocation2 + $0x103]]
    %v301 = vstv %s300
    %v302 = vmul.f32 %v301, %v48
    %304 = vrot.lane.b32.xlu0 %v302, 127
    %v305 = vpop.permute.xlu0 %304
    %v307 = vadd.f32 %v299, %v305
    %s308 = sld [smem:[#allocation2 + $0x104]]
    %v309 = vstv %s308
    %v310 = vmul.f32 %v309, %v46
    %312 = vrot.lane.b32.xlu0 %v310, 126
    %v313 = vpop.permute.xlu0 %312
    %v315 = vadd.f32 %v307, %v313
    %s316 = sld [smem:[#allocation5 + $0x2]]
    %v317 = vstv %s316
    %v318 = vadd.f32 %v315, %v317
    %v319 = vmax.f32 %v318, 0.0
    %s320 = scalar_lea.vmem %s3, 64
    %v321 = vld [vmem:[%s320] sm:$0xff]
    %v322 = vld [vmem:[%s320 + $0x8] sm:$0xff]
    %v323 = vld [vmem:[%s320 + $0x10] sm:$0xff]
    %v324 = vld [vmem:[%s320 + $0x18] sm:$0x3f]
    %v326 = vsel %vm130, %v319, 0
    %v329 = vsel %vm134, %v324, 0
    %331 = vmatprep.subr.mxu0 0.0
    %332 = vmatpush1.msra.mxu0 %v321
    %333 = vmatprep.subr.mxu0 0.0
    %334 = vmatpush1.msra.mxu0 %v322
    %335 = vmatprep.subr.mxu0 0.0
    %336 = vmatpush1.msra.mxu0 %v323
    %337 = vmatprep.subr.mxu0 0.0
    %338 = vmatpush1.msra.mxu0 %v329
    %339 = vmatprep.subr.mxu0 0.0
    %340 = vmatpush1.msra.mxu0 0.0
    %341 = vmatprep.subr.mxu0 0.0
    %342 = vmatpush1.msra.mxu0 0.0
    %343 = vmatprep.subr.mxu0 0.0
    %344 = vmatpush1.msra.mxu0 0.0
    %345 = vmatprep.subr.mxu0 0.0
    %346 = vmatpush1.msra.mxu0 0.0
    %347 = vmatprep.subr.mxu0 0.0
    %348 = vmatpush1.msra.mxu0 0.0
    %349 = vmatprep.subr.mxu0 0.0
    %350 = vmatpush1.msra.mxu0 0.0
    %351 = vmatprep.subr.mxu0 0.0
    %352 = vmatpush1.msra.mxu0 0.0
    %353 = vmatprep.subr.mxu0 0.0
    %354 = vmatpush1.msra.mxu0 0.0
    %355 = vmatprep.subr.mxu0 0.0
    %356 = vmatpush1.msra.mxu0 0.0
    %357 = vmatprep.subr.mxu0 0.0
    %358 = vmatpush1.msra.mxu0 0.0
    %359 = vmatprep.subr.mxu0 0.0
    %360 = vmatpush1.msra.mxu0 0.0
    %361 = vmatprep.subr.mxu0 0.0
    %362 = vmatpush1.msra.mxu0 0.0
    %363 = vmatprep.subr.mxu0 0.0
    %364 = vmatpush1.msra.mxu0 0.0
    %365 = vmatprep.subr.mxu0 0.0
    %366 = vmatpush1.msra.mxu0 0.0
    %367 = vmatprep.subr.mxu0 0.0
    %368 = vmatpush1.msra.mxu0 0.0
    %369 = vmatprep.subr.mxu0 0.0
    %370 = vmatpush1.msra.mxu0 0.0
    %371 = vmatprep.subr.mxu0 0.0
    %372 = vmatpush1.msra.mxu0 0.0
    %373 = vmatprep.subr.mxu0 0.0
    %374 = vmatpush1.msra.mxu0 0.0
    %375 = vmatprep.subr.mxu0 0.0
    %376 = vmatpush1.msra.mxu0 0.0
    %377 = vmatprep.subr.mxu0 0.0
    %378 = vmatpush1.msra.mxu0 0.0
    %379 = vmatprep.subr.mxu0 0.0
    %380 = vmatpush1.msra.mxu0 0.0
    %381 = vmatprep.subr.mxu0 0.0
    %382 = vmatpush1.msra.mxu0 0.0
    %383 = vmatprep.subr.mxu0 0.0
    %384 = vmatpush1.msra.mxu0 0.0
    %385 = vmatprep.subr.mxu0 0.0
    %386 = vmatpush1.msra.mxu0 0.0
    %387 = vmatprep.subr.mxu0 0.0
    %388 = vmatpush1.msra.mxu0 0.0
    %389 = vmatprep.subr.mxu0 0.0
    %390 = vmatpush1.msra.mxu0 0.0
    %391 = vmatprep.subr.mxu0 0.0
    %392 = vmatpush1.msra.mxu0 0.0
    %393 = vmatprep.subr.mxu0 0.0
    %394 = vmatpush1.msra.mxu0 0.0
    %395 = vmatprep.mubr.f32.mxu0 0.0
    %396 = vmatmul.mubr.f32.gmra.mrb[0].mxu0 %v326
    %v397 = vpop.f32.mrb[0].mxu0
    %v398 = vadd.f32 0.0, %v397
    %v399 = vpop.f32.mrb[0].mxu0
    %400 = vdwg.mxu0
    %v401 = vadd.f32 %v281, %v398
    %s402 = sld [smem:[#allocation2 + $0x180]]
    %v403 = vstv %s402
    %v404 = vmul.f32 %v403, %v46
    %v405 = vadd.f32 %v404, 0.0
    %s406 = sld [smem:[#allocation2 + $0x181]]
    %v407 = vstv %s406
    %v408 = vmul.f32 %v407, %v48
    %v409 = vadd.f32 %v405, %v408
    %s410 = sld [smem:[#allocation2 + $0x182]]
    %v411 = vstv %s410
    %v412 = vmul.f32 %v411, %v46
    %414 = vrot.lane.b32.xlu0 %v412, 127
    %v415 = vpop.permute.xlu0 %414
    %v417 = vadd.f32 %v409, %v415
    %s418 = sld [smem:[#allocation2 + $0x183]]
    %v419 = vstv %s418
    %v420 = vmul.f32 %v419, %v48
    %422 = vrot.lane.b32.xlu0 %v420, 127
    %v423 = vpop.permute.xlu0 %422
    %v425 = vadd.f32 %v417, %v423
    %s426 = sld [smem:[#allocation2 + $0x184]]
    %v427 = vstv %s426
    %v428 = vmul.f32 %v427, %v46
    %430 = vrot.lane.b32.xlu0 %v428, 126
    %v431 = vpop.permute.xlu0 %430
    %v433 = vadd.f32 %v425, %v431
    %s434 = sld [smem:[#allocation5 + $0x3]]
    %v435 = vstv %s434
    %v436 = vadd.f32 %v433, %v435
    %v437 = vmax.f32 %v436, 0.0
    %s438 = scalar_lea.vmem %s3, 96
    %v439 = vld [vmem:[%s438] sm:$0xff]
    %v440 = vld [vmem:[%s438 + $0x8] sm:$0xff]
    %v441 = vld [vmem:[%s438 + $0x10] sm:$0xff]
    %v442 = vld [vmem:[%s438 + $0x18] sm:$0x3f]
    %v444 = vsel %vm130, %v437, 0
    %v447 = vsel %vm134, %v442, 0
    %449 = vmatprep.subr.mxu0 0.0
    %450 = vmatpush1.msra.mxu0 %v439
    %451 = vmatprep.subr.mxu0 0.0
    %452 = vmatpush1.msra.mxu0 %v440
    %453 = vmatprep.subr.mxu0 0.0
    %454 = vmatpush1.msra.mxu0 %v441
    %455 = vmatprep.subr.mxu0 0.0
    %456 = vmatpush1.msra.mxu0 %v447
    %457 = vmatprep.subr.mxu0 0.0
    %458 = vmatpush1.msra.mxu0 0.0
    %459 = vmatprep.subr.mxu0 0.0
    %460 = vmatpush1.msra.mxu0 0.0
    %461 = vmatprep.subr.mxu0 0.0
    %462 = vmatpush1.msra.mxu0 0.0
    %463 = vmatprep.subr.mxu0 0.0
    %464 = vmatpush1.msra.mxu0 0.0
    %465 = vmatprep.subr.mxu0 0.0
    %466 = vmatpush1.msra.mxu0 0.0
    %467 = vmatprep.subr.mxu0 0.0
    %468 = vmatpush1.msra.mxu0 0.0
    %469 = vmatprep.subr.mxu0 0.0
    %470 = vmatpush1.msra.mxu0 0.0
    %471 = vmatprep.subr.mxu0 0.0
    %472 = vmatpush1.msra.mxu0 0.0
    %473 = vmatprep.subr.mxu0 0.0
    %474 = vmatpush1.msra.mxu0 0.0
    %475 = vmatprep.subr.mxu0 0.0
    %476 = vmatpush1.msra.mxu0 0.0
    %477 = vmatprep.subr.mxu0 0.0
    %478 = vmatpush1.msra.mxu0 0.0
    %479 = vmatprep.subr.mxu0 0.0
    %480 = vmatpush1.msra.mxu0 0.0
    %481 = vmatprep.subr.mxu0 0.0
    %482 = vmatpush1.msra.mxu0 0.0
    %483 = vmatprep.subr.mxu0 0.0
    %484 = vmatpush1.msra.mxu0 0.0
    %485 = vmatprep.subr.mxu0 0.0
    %486 = vmatpush1.msra.mxu0 0.0
    %487 = vmatprep.subr.mxu0 0.0
    %488 = vmatpush1.msra.mxu0 0.0
    %489 = vmatprep.subr.mxu0 0.0
    %490 = vmatpush1.msra.mxu0 0.0
    %491 = vmatprep.subr.mxu0 0.0
    %492 = vmatpush1.msra.mxu0 0.0
    %493 = vmatprep.subr.mxu0 0.0
    %494 = vmatpush1.msra.mxu0 0.0
    %495 = vmatprep.subr.mxu0 0.0
    %496 = vmatpush1.msra.mxu0 0.0
    %497 = vmatprep.subr.mxu0 0.0
    %498 = vmatpush1.msra.mxu0 0.0
    %499 = vmatprep.subr.mxu0 0.0
    %500 = vmatpush1.msra.mxu0 0.0
    %501 = vmatprep.subr.mxu0 0.0
    %502 = vmatpush1.msra.mxu0 0.0
    %503 = vmatprep.subr.mxu0 0.0
    %504 = vmatpush1.msra.mxu0 0.0
    %505 = vmatprep.subr.mxu0 0.0
    %506 = vmatpush1.msra.mxu0 0.0
    %507 = vmatprep.subr.mxu0 0.0
    %508 = vmatpush1.msra.mxu0 0.0
    %509 = vmatprep.subr.mxu0 0.0
    %510 = vmatpush1.msra.mxu0 0.0
    %511 = vmatprep.subr.mxu0 0.0
    %512 = vmatpush1.msra.mxu0 0.0
    %513 = vmatprep.mubr.f32.mxu0 0.0
    %514 = vmatmul.mubr.f32.gmra.mrb[0].mxu0 %v444
    %v515 = vpop.f32.mrb[0].mxu0
    %v516 = vadd.f32 0.0, %v515
    %v517 = vpop.f32.mrb[0].mxu0
    %518 = vdwg.mxu0
    %v519 = vadd.f32 %v401, %v516
    %s520 = sld [smem:[#allocation2 + $0x200]]
    %v521 = vstv %s520
    %v522 = vmul.f32 %v521, %v46
    %v523 = vadd.f32 %v522, 0.0
    %s524 = sld [smem:[#allocation2 + $0x201]]
    %v525 = vstv %s524
    %v526 = vmul.f32 %v525, %v48
    %v527 = vadd.f32 %v523, %v526
    %s528 = sld [smem:[#allocation2 + $0x202]]
    %v529 = vstv %s528
    %v530 = vmul.f32 %v529, %v46
    %532 = vrot.lane.b32.xlu0 %v530, 127
    %v533 = vpop.permute.xlu0 %532
    %v535 = vadd.f32 %v527, %v533
    %s536 = sld [smem:[#allocation2 + $0x203]]
    %v537 = vstv %s536
    %v538 = vmul.f32 %v537, %v48
    %540 = vrot.lane.b32.xlu0 %v538, 127
    %v541 = vpop.permute.xlu0 %540
    %v543 = vadd.f32 %v535, %v541
    %s544 = sld [smem:[#allocation2 + $0x204]]
    %v545 = vstv %s544
    %v546 = vmul.f32 %v545, %v46
    %548 = vrot.lane.b32.xlu0 %v546, 126
    %v549 = vpop.permute.xlu0 %548
    %v551 = vadd.f32 %v543, %v549
    %s552 = sld [smem:[#allocation5 + $0x4]]
    %v553 = vstv %s552
    %v554 = vadd.f32 %v551, %v553
    %v555 = vmax.f32 %v554, 0.0
    %s556 = scalar_lea.vmem %s3, 128
    %v557 = vld [vmem:[%s556] sm:$0xff]
    %v558 = vld [vmem:[%s556 + $0x8] sm:$0xff]
    %v559 = vld [vmem:[%s556 + $0x10] sm:$0xff]
    %v560 = vld [vmem:[%s556 + $0x18] sm:$0x3f]
    %v562 = vsel %vm130, %v555, 0
    %v565 = vsel %vm134, %v560, 0
    %567 = vmatprep.subr.mxu0 0.0
    %568 = vmatpush1.msra.mxu0 %v557
    %569 = vmatprep.subr.mxu0 0.0
    %570 = vmatpush1.msra.mxu0 %v558
    %571 = vmatprep.subr.mxu0 0.0
    %572 = vmatpush1.msra.mxu0 %v559
    %573 = vmatprep.subr.mxu0 0.0
    %574 = vmatpush1.msra.mxu0 %v565
    %575 = vmatprep.subr.mxu0 0.0
    %576 = vmatpush1.msra.mxu0 0.0
    %577 = vmatprep.subr.mxu0 0.0
    %578 = vmatpush1.msra.mxu0 0.0
    %579 = vmatprep.subr.mxu0 0.0
    %580 = vmatpush1.msra.mxu0 0.0
    %581 = vmatprep.subr.mxu0 0.0
    %582 = vmatpush1.msra.mxu0 0.0
    %583 = vmatprep.subr.mxu0 0.0
    %584 = vmatpush1.msra.mxu0 0.0
    %585 = vmatprep.subr.mxu0 0.0
    %586 = vmatpush1.msra.mxu0 0.0
    %587 = vmatprep.subr.mxu0 0.0
    %588 = vmatpush1.msra.mxu0 0.0
    %589 = vmatprep.subr.mxu0 0.0
    %590 = vmatpush1.msra.mxu0 0.0
    %591 = vmatprep.subr.mxu0 0.0
    %592 = vmatpush1.msra.mxu0 0.0
    %593 = vmatprep.subr.mxu0 0.0
    %594 = vmatpush1.msra.mxu0 0.0
    %595 = vmatprep.subr.mxu0 0.0
    %596 = vmatpush1.msra.mxu0 0.0
    %597 = vmatprep.subr.mxu0 0.0
    %598 = vmatpush1.msra.mxu0 0.0
    %599 = vmatprep.subr.mxu0 0.0
    %600 = vmatpush1.msra.mxu0 0.0
    %601 = vmatprep.subr.mxu0 0.0
    %602 = vmatpush1.msra.mxu0 0.0
    %603 = vmatprep.subr.mxu0 0.0
    %604 = vmatpush1.msra.mxu0 0.0
    %605 = vmatprep.subr.mxu0 0.0
    %606 = vmatpush1.msra.mxu0 0.0
    %607 = vmatprep.subr.mxu0 0.0
    %608 = vmatpush1.msra.mxu0 0.0
    %609 = vmatprep.subr.mxu0 0.0
    %610 = vmatpush1.msra.mxu0 0.0
    %611 = vmatprep.subr.mxu0 0.0
    %612 = vmatpush1.msra.mxu0 0.0
    %613 = vmatprep.subr.mxu0 0.0
    %614 = vmatpush1.msra.mxu0 0.0
    %615 = vmatprep.subr.mxu0 0.0
    %616 = vmatpush1.msra.mxu0 0.0
    %617 = vmatprep.subr.mxu0 0.0
    %618 = vmatpush1.msra.mxu0 0.0
    %619 = vmatprep.subr.mxu0 0.0
    %620 = vmatpush1.msra.mxu0 0.0
    %621 = vmatprep.subr.mxu0 0.0
    %622 = vmatpush1.msra.mxu0 0.0
    %623 = vmatprep.subr.mxu0 0.0
    %624 = vmatpush1.msra.mxu0 0.0
    %625 = vmatprep.subr.mxu0 0.0
    %626 = vmatpush1.msra.mxu0 0.0
    %627 = vmatprep.subr.mxu0 0.0
    %628 = vmatpush1.msra.mxu0 0.0
    %629 = vmatprep.subr.mxu0 0.0
    %630 = vmatpush1.msra.mxu0 0.0
    %631 = vmatprep.mubr.f32.mxu0 0.0
    %632 = vmatmul.mubr.f32.gmra.mrb[0].mxu0 %v562
    %v633 = vpop.f32.mrb[0].mxu0
    %v634 = vadd.f32 0.0, %v633
    %v635 = vpop.f32.mrb[0].mxu0
    %636 = vdwg.mxu0
    %v637 = vadd.f32 %v519, %v634
    %s638 = sld [smem:[#allocation2 + $0x280]]
    %v639 = vstv %s638
    %v640 = vmul.f32 %v639, %v46
    %v641 = vadd.f32 %v640, 0.0
    %s642 = sld [smem:[#allocation2 + $0x281]]
    %v643 = vstv %s642
    %v644 = vmul.f32 %v643, %v48
    %v645 = vadd.f32 %v641, %v644
    %s646 = sld [smem:[#allocation2 + $0x282]]
    %v647 = vstv %s646
    %v648 = vmul.f32 %v647, %v46
    %650 = vrot.lane.b32.xlu0 %v648, 127
    %v651 = vpop.permute.xlu0 %650
    %v653 = vadd.f32 %v645, %v651
    %s654 = sld [smem:[#allocation2 + $0x283]]
    %v655 = vstv %s654
    %v656 = vmul.f32 %v655, %v48
    %658 = vrot.lane.b32.xlu0 %v656, 127
    %v659 = vpop.permute.xlu0 %658
    %v661 = vadd.f32 %v653, %v659
    %s662 = sld [smem:[#allocation2 + $0x284]]
    %v663 = vstv %s662
    %v664 = vmul.f32 %v663, %v46
    %666 = vrot.lane.b32.xlu0 %v664, 126
    %v667 = vpop.permute.xlu0 %666
    %v669 = vadd.f32 %v661, %v667
    %s670 = sld [smem:[#allocation5 + $0x5]]
    %v671 = vstv %s670
    %v672 = vadd.f32 %v669, %v671
    %v673 = vmax.f32 %v672, 0.0
    %s674 = scalar_lea.vmem %s3, 160
    %v675 = vld [vmem:[%s674] sm:$0xff]
    %v676 = vld [vmem:[%s674 + $0x8] sm:$0xff]
    %v677 = vld [vmem:[%s674 + $0x10] sm:$0xff]
    %v678 = vld [vmem:[%s674 + $0x18] sm:$0x3f]
    %v680 = vsel %vm130, %v673, 0
    %v683 = vsel %vm134, %v678, 0
    %685 = vmatprep.subr.mxu0 0.0
    %686 = vmatpush1.msra.mxu0 %v675
    %687 = vmatprep.subr.mxu0 0.0
    %688 = vmatpush1.msra.mxu0 %v676
    %689 = vmatprep.subr.mxu0 0.0
    %690 = vmatpush1.msra.mxu0 %v677
    %691 = vmatprep.subr.mxu0 0.0
    %692 = vmatpush1.msra.mxu0 %v683
    %693 = vmatprep.subr.mxu0 0.0
    %694 = vmatpush1.msra.mxu0 0.0
    %695 = vmatprep.subr.mxu0 0.0
    %696 = vmatpush1.msra.mxu0 0.0
    %697 = vmatprep.subr.mxu0 0.0
    %698 = vmatpush1.msra.mxu0 0.0
    %699 = vmatprep.subr.mxu0 0.0
    %700 = vmatpush1.msra.mxu0 0.0
    %701 = vmatprep.subr.mxu0 0.0
    %702 = vmatpush1.msra.mxu0 0.0
    %703 = vmatprep.subr.mxu0 0.0
    %704 = vmatpush1.msra.mxu0 0.0
    %705 = vmatprep.subr.mxu0 0.0
    %706 = vmatpush1.msra.mxu0 0.0
    %707 = vmatprep.subr.mxu0 0.0
    %708 = vmatpush1.msra.mxu0 0.0
    %709 = vmatprep.subr.mxu0 0.0
    %710 = vmatpush1.msra.mxu0 0.0
    %711 = vmatprep.subr.mxu0 0.0
    %712 = vmatpush1.msra.mxu0 0.0
    %713 = vmatprep.subr.mxu0 0.0
    %714 = vmatpush1.msra.mxu0 0.0
    %715 = vmatprep.subr.mxu0 0.0
    %716 = vmatpush1.msra.mxu0 0.0
    %717 = vmatprep.subr.mxu0 0.0
    %718 = vmatpush1.msra.mxu0 0.0
    %719 = vmatprep.subr.mxu0 0.0
    %720 = vmatpush1.msra.mxu0 0.0
    %721 = vmatprep.subr.mxu0 0.0
    %722 = vmatpush1.msra.mxu0 0.0
    %723 = vmatprep.subr.mxu0 0.0
    %724 = vmatpush1.msra.mxu0 0.0
    %725 = vmatprep.subr.mxu0 0.0
    %726 = vmatpush1.msra.mxu0 0.0
    %727 = vmatprep.subr.mxu0 0.0
    %728 = vmatpush1.msra.mxu0 0.0
    %729 = vmatprep.subr.mxu0 0.0
    %730 = vmatpush1.msra.mxu0 0.0
    %731 = vmatprep.subr.mxu0 0.0
    %732 = vmatpush1.msra.mxu0 0.0
    %733 = vmatprep.subr.mxu0 0.0
    %734 = vmatpush1.msra.mxu0 0.0
    %735 = vmatprep.subr.mxu0 0.0
    %736 = vmatpush1.msra.mxu0 0.0
    %737 = vmatprep.subr.mxu0 0.0
    %738 = vmatpush1.msra.mxu0 0.0
    %739 = vmatprep.subr.mxu0 0.0
    %740 = vmatpush1.msra.mxu0 0.0
    %741 = vmatprep.subr.mxu0 0.0
    %742 = vmatpush1.msra.mxu0 0.0
    %743 = vmatprep.subr.mxu0 0.0
    %744 = vmatpush1.msra.mxu0 0.0
    %745 = vmatprep.subr.mxu0 0.0
    %746 = vmatpush1.msra.mxu0 0.0
    %747 = vmatprep.subr.mxu0 0.0
    %748 = vmatpush1.msra.mxu0 0.0
    %749 = vmatprep.mubr.f32.mxu0 0.0
    %750 = vmatmul.mubr.f32.gmra.mrb[0].mxu0 %v680
    %v751 = vpop.f32.mrb[0].mxu0
    %v752 = vadd.f32 0.0, %v751
    %v753 = vpop.f32.mrb[0].mxu0
    %754 = vdwg.mxu0
    %v755 = vadd.f32 %v637, %v752
    %s756 = sld [smem:[#allocation2 + $0x300]]
    %v757 = vstv %s756
    %v758 = vmul.f32 %v757, %v46
    %v759 = vadd.f32 %v758, 0.0
    %s760 = sld [smem:[#allocation2 + $0x301]]
    %v761 = vstv %s760
    %v762 = vmul.f32 %v761, %v48
    %v763 = vadd.f32 %v759, %v762
    %s764 = sld [smem:[#allocation2 + $0x302]]
    %v765 = vstv %s764
    %v766 = vmul.f32 %v765, %v46
    %768 = vrot.lane.b32.xlu0 %v766, 127
    %v769 = vpop.permute.xlu0 %768
    %v771 = vadd.f32 %v763, %v769
    %s772 = sld [smem:[#allocation2 + $0x303]]
    %v773 = vstv %s772
    %v774 = vmul.f32 %v773, %v48
    %776 = vrot.lane.b32.xlu0 %v774, 127
    %v777 = vpop.permute.xlu0 %776
    %v779 = vadd.f32 %v771, %v777
    %s780 = sld [smem:[#allocation2 + $0x304]]
    %v781 = vstv %s780
    %v782 = vmul.f32 %v781, %v46
    %784 = vrot.lane.b32.xlu0 %v782, 126
    %v785 = vpop.permute.xlu0 %784
    %v787 = vadd.f32 %v779, %v785
    %s788 = sld [smem:[#allocation5 + $0x6]]
    %v789 = vstv %s788
    %v790 = vadd.f32 %v787, %v789
    %v791 = vmax.f32 %v790, 0.0
    %s792 = scalar_lea.vmem %s3, 192
    %v793 = vld [vmem:[%s792] sm:$0xff]
    %v794 = vld [vmem:[%s792 + $0x8] sm:$0xff]
    %v795 = vld [vmem:[%s792 + $0x10] sm:$0xff]
    %v796 = vld [vmem:[%s792 + $0x18] sm:$0x3f]
    %v798 = vsel %vm130, %v791, 0
    %v801 = vsel %vm134, %v796, 0
    %803 = vmatprep.subr.mxu0 0.0
    %804 = vmatpush1.msra.mxu0 %v793
    %805 = vmatprep.subr.mxu0 0.0
    %806 = vmatpush1.msra.mxu0 %v794
    %807 = vmatprep.subr.mxu0 0.0
    %808 = vmatpush1.msra.mxu0 %v795
    %809 = vmatprep.subr.mxu0 0.0
    %810 = vmatpush1.msra.mxu0 %v801
    %811 = vmatprep.subr.mxu0 0.0
    %812 = vmatpush1.msra.mxu0 0.0
    %813 = vmatprep.subr.mxu0 0.0
    %814 = vmatpush1.msra.mxu0 0.0
    %815 = vmatprep.subr.mxu0 0.0
    %816 = vmatpush1.msra.mxu0 0.0
    %817 = vmatprep.subr.mxu0 0.0
    %818 = vmatpush1.msra.mxu0 0.0
    %819 = vmatprep.subr.mxu0 0.0
    %820 = vmatpush1.msra.mxu0 0.0
    %821 = vmatprep.subr.mxu0 0.0
    %822 = vmatpush1.msra.mxu0 0.0
    %823 = vmatprep.subr.mxu0 0.0
    %824 = vmatpush1.msra.mxu0 0.0
    %825 = vmatprep.subr.mxu0 0.0
    %826 = vmatpush1.msra.mxu0 0.0
    %827 = vmatprep.subr.mxu0 0.0
    %828 = vmatpush1.msra.mxu0 0.0
    %829 = vmatprep.subr.mxu0 0.0
    %830 = vmatpush1.msra.mxu0 0.0
    %831 = vmatprep.subr.mxu0 0.0
    %832 = vmatpush1.msra.mxu0 0.0
    %833 = vmatprep.subr.mxu0 0.0
    %834 = vmatpush1.msra.mxu0 0.0
    %835 = vmatprep.subr.mxu0 0.0
    %836 = vmatpush1.msra.mxu0 0.0
    %837 = vmatprep.subr.mxu0 0.0
    %838 = vmatpush1.msra.mxu0 0.0
    %839 = vmatprep.subr.mxu0 0.0
    %840 = vmatpush1.msra.mxu0 0.0
    %841 = vmatprep.subr.mxu0 0.0
    %842 = vmatpush1.msra.mxu0 0.0
    %843 = vmatprep.subr.mxu0 0.0
    %844 = vmatpush1.msra.mxu0 0.0
    %845 = vmatprep.subr.mxu0 0.0
    %846 = vmatpush1.msra.mxu0 0.0
    %847 = vmatprep.subr.mxu0 0.0
    %848 = vmatpush1.msra.mxu0 0.0
    %849 = vmatprep.subr.mxu0 0.0
    %850 = vmatpush1.msra.mxu0 0.0
    %851 = vmatprep.subr.mxu0 0.0
    %852 = vmatpush1.msra.mxu0 0.0
    %853 = vmatprep.subr.mxu0 0.0
    %854 = vmatpush1.msra.mxu0 0.0
    %855 = vmatprep.subr.mxu0 0.0
    %856 = vmatpush1.msra.mxu0 0.0
    %857 = vmatprep.subr.mxu0 0.0
    %858 = vmatpush1.msra.mxu0 0.0
    %859 = vmatprep.subr.mxu0 0.0
    %860 = vmatpush1.msra.mxu0 0.0
    %861 = vmatprep.subr.mxu0 0.0
    %862 = vmatpush1.msra.mxu0 0.0
    %863 = vmatprep.subr.mxu0 0.0
    %864 = vmatpush1.msra.mxu0 0.0
    %865 = vmatprep.subr.mxu0 0.0
    %866 = vmatpush1.msra.mxu0 0.0
    %867 = vmatprep.mubr.f32.mxu0 0.0
    %868 = vmatmul.mubr.f32.gmra.mrb[0].mxu0 %v798
    %v869 = vpop.f32.mrb[0].mxu0
    %v870 = vadd.f32 0.0, %v869
    %v871 = vpop.f32.mrb[0].mxu0
    %872 = vdwg.mxu0
    %v873 = vadd.f32 %v755, %v870
    %s874 = sld [smem:[#allocation2 + $0x380]]
    %v875 = vstv %s874
    %v876 = vmul.f32 %v875, %v46
    %v877 = vadd.f32 %v876, 0.0
    %s878 = sld [smem:[#allocation2 + $0x381]]
    %v879 = vstv %s878
    %v880 = vmul.f32 %v879, %v48
    %v881 = vadd.f32 %v877, %v880
    %s882 = sld [smem:[#allocation2 + $0x382]]
    %v883 = vstv %s882
    %v884 = vmul.f32 %v883, %v46
    %886 = vrot.lane.b32.xlu0 %v884, 127
    %v887 = vpop.permute.xlu0 %886
    %v889 = vadd.f32 %v881, %v887
    %s890 = sld [smem:[#allocation2 + $0x383]]
    %v891 = vstv %s890
    %v892 = vmul.f32 %v891, %v48
    %894 = vrot.lane.b32.xlu0 %v892, 127
    %v895 = vpop.permute.xlu0 %894
    %v897 = vadd.f32 %v889, %v895
    %s898 = sld [smem:[#allocation2 + $0x384]]
    %v899 = vstv %s898
    %v900 = vmul.f32 %v899, %v46
    %902 = vrot.lane.b32.xlu0 %v900, 126
    %v903 = vpop.permute.xlu0 %902
    %v905 = vadd.f32 %v897, %v903
    %s906 = sld [smem:[#allocation5 + $0x7]]
    %v907 = vstv %s906
    %v908 = vadd.f32 %v905, %v907
    %v909 = vmax.f32 %v908, 0.0
    %s910 = scalar_lea.vmem %s3, 224
    %v911 = vld [vmem:[%s910] sm:$0xff]
    %v912 = vld [vmem:[%s910 + $0x8] sm:$0xff]
    %v913 = vld [vmem:[%s910 + $0x10] sm:$0xff]
    %v914 = vld [vmem:[%s910 + $0x18] sm:$0x3f]
    %v916 = vsel %vm130, %v909, 0
    %v919 = vsel %vm134, %v914, 0
    %921 = vmatprep.subr.mxu0 0.0
    %922 = vmatpush1.msra.mxu0 %v911
    %923 = vmatprep.subr.mxu0 0.0
    %924 = vmatpush1.msra.mxu0 %v912
    %925 = vmatprep.subr.mxu0 0.0
    %926 = vmatpush1.msra.mxu0 %v913
    %927 = vmatprep.subr.mxu0 0.0
    %928 = vmatpush1.msra.mxu0 %v919
    %929 = vmatprep.subr.mxu0 0.0
    %930 = vmatpush1.msra.mxu0 0.0
    %931 = vmatprep.subr.mxu0 0.0
    %932 = vmatpush1.msra.mxu0 0.0
    %933 = vmatprep.subr.mxu0 0.0
    %934 = vmatpush1.msra.mxu0 0.0
    %935 = vmatprep.subr.mxu0 0.0
    %936 = vmatpush1.msra.mxu0 0.0
    %937 = vmatprep.subr.mxu0 0.0
    %938 = vmatpush1.msra.mxu0 0.0
    %939 = vmatprep.subr.mxu0 0.0
    %940 = vmatpush1.msra.mxu0 0.0
    %941 = vmatprep.subr.mxu0 0.0
    %942 = vmatpush1.msra.mxu0 0.0
    %943 = vmatprep.subr.mxu0 0.0
    %944 = vmatpush1.msra.mxu0 0.0
    %945 = vmatprep.subr.mxu0 0.0
    %946 = vmatpush1.msra.mxu0 0.0
    %947 = vmatprep.subr.mxu0 0.0
    %948 = vmatpush1.msra.mxu0 0.0
    %949 = vmatprep.subr.mxu0 0.0
    %950 = vmatpush1.msra.mxu0 0.0
    %951 = vmatprep.subr.mxu0 0.0
    %952 = vmatpush1.msra.mxu0 0.0
    %953 = vmatprep.subr.mxu0 0.0
    %954 = vmatpush1.msra.mxu0 0.0
    %955 = vmatprep.subr.mxu0 0.0
    %956 = vmatpush1.msra.mxu0 0.0
    %957 = vmatprep.subr.mxu0 0.0
    %958 = vmatpush1.msra.mxu0 0.0
    %959 = vmatprep.subr.mxu0 0.0
    %960 = vmatpush1.msra.mxu0 0.0
    %961 = vmatprep.subr.mxu0 0.0
    %962 = vmatpush1.msra.mxu0 0.0
    %963 = vmatprep.subr.mxu0 0.0
    %964 = vmatpush1.msra.mxu0 0.0
    %965 = vmatprep.subr.mxu0 0.0
    %966 = vmatpush1.msra.mxu0 0.0
    %967 = vmatprep.subr.mxu0 0.0
    %968 = vmatpush1.msra.mxu0 0.0
    %969 = vmatprep.subr.mxu0 0.0
    %970 = vmatpush1.msra.mxu0 0.0
    %971 = vmatprep.subr.mxu0 0.0
    %972 = vmatpush1.msra.mxu0 0.0
    %973 = vmatprep.subr.mxu0 0.0
    %974 = vmatpush1.msra.mxu0 0.0
    %975 = vmatprep.subr.mxu0 0.0
    %976 = vmatpush1.msra.mxu0 0.0
    %977 = vmatprep.subr.mxu0 0.0
    %978 = vmatpush1.msra.mxu0 0.0
    %979 = vmatprep.subr.mxu0 0.0
    %980 = vmatpush1.msra.mxu0 0.0
    %981 = vmatprep.subr.mxu0 0.0
    %982 = vmatpush1.msra.mxu0 0.0
    %983 = vmatprep.subr.mxu0 0.0
    %984 = vmatpush1.msra.mxu0 0.0
    %985 = vmatprep.mubr.f32.mxu0 0.0
    %986 = vmatmul.mubr.f32.gmra.mrb[0].mxu0 %v916
    %v987 = vpop.f32.mrb[0].mxu0
    %v988 = vadd.f32 0.0, %v987
    %v989 = vpop.f32.mrb[0].mxu0
    %990 = vdwg.mxu0
    %v991 = vadd.f32 %v873, %v988
    %v992 = vld [vmem:[%s4] sm:$0x1]
    %v994 = vlaneseq
    %v995 = vshrl.u32 %v994, 7
    %v996 = vsub.s32 0, %v995
    %v997 = vrot.slane %v992, %v996
    %v999 = vadd.f32 %v991, %v997
    %vm1000 = vcmask 1041408
    %v1001 = vsel %vm1000, %v999, -inf
    %1002 = vmax.xlane.f32.xlu0 %v1001
    %v1003 = vpop.xlane.xlu0 %1002
    %v1004 = vsub.f32 %v999, %v1003
    %v1005 = vmul.f32 %v1004, 1.442695
    %v1006 = vpow.pop %v1005
    %v1007 = vsel %vm1000, %v1006, 0.0
    %1008 = vadd.xlane.f32.xlu0 %v1007
    %v1009 = vpop.xlane.xlu0 %1008
    %v1010 = vrcp.pop %v1009
    %v1011 = vmul.f32 %v1006, %v1010
    %1012 = vst [vmem:[#allocation7] sm:$0x3] %v1011
    // Predicated region
    $region30: #{net_forward.1} parent=1 // pred_check
      _
    $region31: #{net_forward.1} parent=1 // pred_check_branch
      %1014 = sbr.rel (0) target = $region33
    $region32: #{net_forward.1} parent=1 // pred_region
      %s1016 = ssub.s32 32, 32
      %1017 = vsyncadd [#allocation3], %s1016
      %s1019 = sshll.u32 [#allocation7], 4
      %s1020 = int_to_ptr.vmem [resolvable:$true] %s1019
      %1022 = dma.vmem_to_hbm [thread:$0]  %s1020, 32, %s5, [#allocation3]
    $region33: #{net_forward.1} parent=1 // pred_fallthru
      _
    // Predicated region
    $region34: #{net_forward.1} parent=1 // pred_check
      _
    $region35: #{net_forward.1} parent=1 // pred_check_branch
      %1024 = sbr.rel (0) target = $region37
    $region36: #{net_forward.1} parent=1 // pred_region
      %1025 = dma.done [#allocation3], 32
    $region37: #{net_forward.1} parent=1 // pred_fallthru
      _
    %1026 = vsyncpa [#allocation3], 1
    %1027 = vsyncpa [#allocation4], 1
    %1028 = vsyncpa [#allocation6], 1

</llo_original>
